<compile_context>
chip_gen: v7x
topology: tpu7x:2x2x1
jax: 0.10.0
libtpu: 0.0.40
codegen_flags: <defaults>
</compile_context>

<pallas_src>
import jax
import jax.numpy as jnp
from jax.experimental import pallas as pl
from jax.experimental.pallas import tpu as pltpu

EPS = 1e-5  # nn.LayerNorm default


def prenorm_kernel(x_ref, gamma_ref, beta_ref, w_ref, b_ref, o_ref):
    # x: (TM, D); gamma/beta: (1, D); w: (D, TH) bf16; b: (1, TH); o: (TM, TH)
    x = x_ref[...].astype(jnp.float32)

    # LayerNorm over the full channel dim D, f32 statistics, biased variance
    # + eps inside the rsqrt, matching torch.nn.LayerNorm.  Two-pass mean/var
    # kept for numerical stability; rsqrt goes to the EUP (free slot).
    mean = jnp.mean(x, axis=-1, keepdims=True)
    xc = x - mean
    var = jnp.mean(xc * xc, axis=-1, keepdims=True)
    inv = jax.lax.rsqrt(var + EPS)

    gamma = gamma_ref[...].astype(jnp.float32)
    beta = beta_ref[...].astype(jnp.float32)
    y = xc * inv * gamma + beta  # (1, D) params broadcast over the TM rows

    # fn = Linear(dim, hidden): bf16 operands on the MXU, f32 accumulation.
    out = jnp.dot(
        y.astype(w_ref.dtype), w_ref[...],
        preferred_element_type=jnp.float32,
    )
    out = out + b_ref[...].astype(jnp.float32)

    o_ref[...] = out.astype(o_ref.dtype)


def prenorm_linear(x, gamma, beta, w, b, *, tm=512, th=None, out_dtype=None):
    """Fused LayerNorm(dim) + Linear(dim, hidden).

    x: (..., D); gamma/beta: (D,); w: (D, H); b: (H,) -> (..., H).

    Contract: LayerNorm statistics are f32; the Linear is evaluated with bf16
    operands on the MXU and f32 accumulation.  Output dtype follows the input
    dtype (pass bf16 activations to halve HBM traffic) unless `out_dtype` is
    given.  `tm` is the token tile (prefer multiples of 256); `th` optionally
    tiles the hidden dim for very large weights (v7x: use if D*H bf16 bytes
    exceed ~16 MiB) and must divide H.
    """
    D = x.shape[-1]
    lead = x.shape[:-1]
    H = w.shape[1]
    out_dtype = x.dtype if out_dtype is None else jnp.dtype(out_dtype)

    assert tm % 16 == 0, "tm must be a multiple of 16 (bf16 sublane packing)"
    th = H if th is None else th
    assert H % th == 0, f"H={H} must be divisible by hidden tile th={th}"
    assert th % 128 == 0 or th == H, "hidden tile must be lane-dense (x128)"
    n_h = H // th

    x2 = x.reshape(-1, D)
    M = x2.shape[0]

    # Pad the flattened token axis to a multiple of tm (no clamping of tm to
    # the sequence length).  Zero rows are numerically safe through LayerNorm
    # (xc == 0) and are sliced off afterwards.
    n_m = pl.cdiv(M, tm)
    m_pad = n_m * tm
    if m_pad != M:
        x2 = jnp.pad(x2, ((0, m_pad - M), (0, 0)))

    gamma2 = gamma.reshape(1, D)
    beta2 = beta.reshape(1, D)
    b2 = b.reshape(1, H)
    # Feed the MXU its native high-rate bf16 path; halves weight DMA bytes.
    w_bf16 = w.astype(jnp.bfloat16)

    cost = pl.CostEstimate(
        flops=2 * m_pad * D * H,
        transcendentals=m_pad,  # one rsqrt per token row (per H tile)
        bytes_accessed=(
            m_pad * D * jnp.dtype(x2.dtype).itemsize      # x in
            + D * H * 2                                   # bf16 weight, once
            + m_pad * H * jnp.dtype(out_dtype).itemsize   # out
            + (2 * D + H) * 4                             # gamma, beta, bias
        ),
    )

    def call(const_pipeline_mode):
        def const_spec(shape, index_map):
            # Grid-invariant (or slowest-axis-only) operands: single buffer.
            if const_pipeline_mode is None:
                return pl.BlockSpec(shape, index_map)
            return pl.BlockSpec(shape, index_map,
                                pipeline_mode=const_pipeline_mode)

        return pl.pallas_call(
            prenorm_kernel,
            out_shape=jax.ShapeDtypeStruct((m_pad, H), out_dtype),
            grid_spec=pltpu.PrefetchScalarGridSpec(
                num_scalar_prefetch=0,
                # H axis slowest: each (D, th) weight tile is DMA'd once and
                # then stays resident across all token steps.
                grid=(n_h, n_m),
                in_specs=[
                    pl.BlockSpec((tm, D), lambda hi, ti: (ti, 0)),
                    const_spec((1, D), lambda hi, ti: (0, 0)),
                    const_spec((1, D), lambda hi, ti: (0, 0)),
                    const_spec((D, th), lambda hi, ti: (0, hi)),
                    const_spec((1, th), lambda hi, ti: (0, hi)),
                ],
                out_specs=pl.BlockSpec((tm, th), lambda hi, ti: (ti, hi)),
            ),
            compiler_params=pltpu.CompilerParams(
                # Both axes independent -> shards across v7x's 2 TensorCores.
                dimension_semantics=("parallel", "parallel"),
                # Above the 16/32 MiB scoped defaults (v5e/v6e), headroom
                # under v7x's 64 MiB physical VMEM.
                vmem_limit_bytes=48 * 1024 * 1024,
            ),
            cost_estimate=cost,
        )(x2, gamma2, beta2, w_bf16, b2)

    try:
        out = call(pl.Buffered(buffer_count=1))
    except Exception:
        # Fallback: default double buffering for the resident operands if this
        # jax build rejects single-buffered pallas_call inputs.
        out = call(None)

    if m_pad != M:
        out = out[:M]
    return out.reshape(*lead, H)


def prenorm_linear_ref(x, gamma, beta, w, b):
    """Pure-JAX f32 reference matching PyTorch PreNorm(dim, Linear(dim, H))."""
    xf = x.astype(jnp.float32)
    mean = jnp.mean(xf, axis=-1, keepdims=True)
    var = jnp.mean((xf - mean) ** 2, axis=-1, keepdims=True)
    xn = (xf - mean) * jax.lax.rsqrt(var + EPS)
    y = xn * gamma + beta
    return y @ w.astype(jnp.float32) + b


if __name__ == "__main__":
    # Small ViT-flavored shapes, lane-dense channel dims (multiples of 128).
    B, N, D, H = 2, 16, 128, 128

    key = jax.random.PRNGKey(0)
    kx, kg, kb, kw, kbias = jax.random.split(key, 5)

    # nn.LayerNorm(dim) params, perturbed from default init so scale/shift
    # are actually exercised; fn = Linear(dim, hidden) params.
    gamma = 1.0 + 0.1 * jax.random.normal(kg, (D,), dtype=jnp.float32)
    beta = 0.1 * jax.random.normal(kb, (D,), dtype=jnp.float32)
    w = jax.random.normal(kw, (D, H), dtype=jnp.float32) / jnp.sqrt(D)
    b = 0.1 * jax.random.normal(kbias, (H,), dtype=jnp.float32)

    # f32 activations (original PyTorch dtype).
    x_f32 = jax.random.normal(kx, (B, N, D), dtype=jnp.float32)
    out_f32 = prenorm_linear(x_f32, gamma, beta, w, b)
    jax.block_until_ready(out_f32)
    assert out_f32.shape == (B, N, H)
    ref_f32 = prenorm_linear_ref(x_f32, gamma, beta, w, b)
    # bf16 MXU operands with f32 accumulation -> loosened tolerance vs f32 ref.
    assert jnp.allclose(out_f32, ref_f32, atol=2e-2, rtol=2e-2), \
        "f32-path mismatch vs reference"

    # bf16 activations in -> bf16 out (the HBM-traffic-halving path).
    x_bf16 = x_f32.astype(jnp.bfloat16)
    out_bf16 = prenorm_linear(x_bf16, gamma, beta, w, b)
    jax.block_until_ready(out_bf16)
    assert out_bf16.shape == (B, N, H) and out_bf16.dtype == jnp.bfloat16
    ref_bf16 = prenorm_linear_ref(x_bf16, gamma, beta, w, b)
    assert jnp.allclose(out_bf16.astype(jnp.float32), ref_bf16,
                        atol=5e-2, rtol=5e-2), "bf16-path mismatch vs reference"

    print("KERNEL_OK")
</pallas_src>

<mosaic_0001>
module attributes {stable_mosaic.version = 11 : i64} {
  func.func @prenorm_kernel(%arg0: i32, %arg1: i32, %arg2: memref<512x128xf32, #tpu.memory_space<vmem>>, %arg3: memref<1x128xf32, #tpu.memory_space<vmem>>, %arg4: memref<1x128xf32, #tpu.memory_space<vmem>>, %arg5: memref<128x128xbf16, #tpu.memory_space<vmem>>, %arg6: memref<1x128xf32, #tpu.memory_space<vmem>>, %arg7: memref<512x128xf32, #tpu.memory_space<vmem>>) attributes {dimension_semantics = [#tpu.dimension_semantics<parallel>, #tpu.dimension_semantics<parallel>], iteration_bounds = array<i64: 1, 1>, scalar_prefetch = 0 : i64, scratch_operands = 0 : i64, tpu.core_type = #tpu.core_type<tc>, window_params = [{transform_indices = @transform_0, window_bounds = array<i64: 512, 128>}, {pipeline_mode = #tpu.pipeline_mode<synchronous>, transform_indices = @transform_1, window_bounds = array<i64: 1, 128>}, {pipeline_mode = #tpu.pipeline_mode<synchronous>, transform_indices = @transform_2, window_bounds = array<i64: 1, 128>}, {pipeline_mode = #tpu.pipeline_mode<synchronous>, transform_indices = @transform_3, window_bounds = array<i64: 128, 128>}, {pipeline_mode = #tpu.pipeline_mode<synchronous>, transform_indices = @transform_4, window_bounds = array<i64: 1, 128>}, {transform_indices = @transform_5, window_bounds = array<i64: 512, 128>}]} {
    %c0 = arith.constant 0 : index
    %c0_0 = arith.constant 0 : index
    %0 = vector.load %arg2[%c0, %c0_0] : memref<512x128xf32, #tpu.memory_space<vmem>>, vector<512x128xf32>
    %cst = arith.constant dense<0.000000e+00> : vector<512xf32>
    %1 = vector.multi_reduction <add>, %0, %cst [1] : vector<512x128xf32> to vector<512xf32>
    %2 = vector.shape_cast %1 : vector<512xf32> to vector<512x1xf32>
    %cst_1 = arith.constant 1.280000e+02 : f32
    %3 = vector.broadcast %cst_1 : f32 to vector<512x1xf32>
    %4 = arith.divf %2, %3 : vector<512x1xf32>
    %5 = vector.broadcast %4 : vector<512x1xf32> to vector<512x128xf32>
    %6 = arith.subf %0, %5 : vector<512x128xf32>
    %7 = arith.mulf %6, %6 : vector<512x128xf32>
    %cst_2 = arith.constant dense<0.000000e+00> : vector<512xf32>
    %8 = vector.multi_reduction <add>, %7, %cst_2 [1] : vector<512x128xf32> to vector<512xf32>
    %9 = vector.shape_cast %8 : vector<512xf32> to vector<512x1xf32>
    %cst_3 = arith.constant 1.280000e+02 : f32
    %10 = vector.broadcast %cst_3 : f32 to vector<512x1xf32>
    %11 = arith.divf %9, %10 : vector<512x1xf32>
    %cst_4 = arith.constant 9.99999974E-6 : f32
    %12 = vector.broadcast %cst_4 : f32 to vector<512x1xf32>
    %13 = arith.addf %11, %12 : vector<512x1xf32>
    %14 = math.rsqrt %13 : vector<512x1xf32>
    %c0_5 = arith.constant 0 : index
    %c0_6 = arith.constant 0 : index
    %15 = vector.load %arg3[%c0_5, %c0_6] : memref<1x128xf32, #tpu.memory_space<vmem>>, vector<1x128xf32>
    %c0_7 = arith.constant 0 : index
    %c0_8 = arith.constant 0 : index
    %16 = vector.load %arg4[%c0_7, %c0_8] : memref<1x128xf32, #tpu.memory_space<vmem>>, vector<1x128xf32>
    %17 = vector.broadcast %14 : vector<512x1xf32> to vector<512x128xf32>
    %18 = arith.mulf %6, %17 : vector<512x128xf32>
    %19 = vector.broadcast %15 : vector<1x128xf32> to vector<512x128xf32>
    %20 = arith.mulf %18, %19 : vector<512x128xf32>
    %21 = vector.broadcast %16 : vector<1x128xf32> to vector<512x128xf32>
    %22 = arith.addf %20, %21 : vector<512x128xf32>
    %23 = arith.truncf %22 : vector<512x128xf32> to vector<512x128xbf16>
    %c0_9 = arith.constant 0 : index
    %c0_10 = arith.constant 0 : index
    %24 = vector.load %arg5[%c0_9, %c0_10] : memref<128x128xbf16, #tpu.memory_space<vmem>>, vector<128x128xbf16>
    %cst_11 = arith.constant dense<0.000000e+00> : vector<512x128xf32>
    %25 = tpu.matmul %23, %24, %cst_11 {dimension_numbers = #tpu.dot_dimension_numbers<[1], [0], [0], [1], [0, 0, 1, 1], [], []>} : vector<512x128xbf16>, vector<128x128xbf16>, vector<512x128xf32> -> vector<512x128xf32>
    %c0_12 = arith.constant 0 : index
    %c0_13 = arith.constant 0 : index
    %26 = vector.load %arg6[%c0_12, %c0_13] : memref<1x128xf32, #tpu.memory_space<vmem>>, vector<1x128xf32>
    %27 = vector.broadcast %26 : vector<1x128xf32> to vector<512x128xf32>
    %28 = arith.addf %25, %27 : vector<512x128xf32>
    %c0_14 = arith.constant 0 : index
    %c0_15 = arith.constant 0 : index
    %29 = vector.load %arg7[%c0_14, %c0_15] : memref<512x128xf32, #tpu.memory_space<vmem>>, vector<512x128xf32>
    tpu.vector_store %arg7[%c0_14, %c0_15], %28 {strides = array<i32>} : memref<512x128xf32, #tpu.memory_space<vmem>>, vector<512x128xf32>,
    return
  }
  func.func @transform_0(%arg0: i32, %arg1: i32) -> (i32, i32) {
    %c0_i32 = arith.constant 0 : i32
    %c0_i32_0 = arith.constant 0 : i32
    return %arg1, %c0_i32 : i32, i32
  }
  func.func @transform_1(%arg0: i32, %arg1: i32) -> (i32, i32) {
    %c0_i32 = arith.constant 0 : i32
    %c0_i32_0 = arith.constant 0 : i32
    %c0_i32_1 = arith.constant 0 : i32
    return %c0_i32, %c0_i32_0 : i32, i32
  }
  func.func @transform_2(%arg0: i32, %arg1: i32) -> (i32, i32) {
    %c0_i32 = arith.constant 0 : i32
    %c0_i32_0 = arith.constant 0 : i32
    %c0_i32_1 = arith.constant 0 : i32
    return %c0_i32, %c0_i32_0 : i32, i32
  }
  func.func @transform_3(%arg0: i32, %arg1: i32) -> (i32, i32) {
    %c0_i32 = arith.constant 0 : i32
    %c0_i32_0 = arith.constant 0 : i32
    return %c0_i32, %arg0 : i32, i32
  }
  func.func @transform_4(%arg0: i32, %arg1: i32) -> (i32, i32) {
    %c0_i32 = arith.constant 0 : i32
    %c0_i32_0 = arith.constant 0 : i32
    return %c0_i32, %arg0 : i32, i32
  }
  func.func @transform_5(%arg0: i32, %arg1: i32) -> (i32, i32) {
    %c0_i32 = arith.constant 0 : i32
    return %arg1, %arg0 : i32, i32
  }
}

module attributes {stable_mosaic.version = 11 : i64} {
  func.func @prenorm_kernel(%arg0: i32, %arg1: i32, %arg2: memref<512x128xf32, #tpu.memory_space<vmem>>, %arg3: memref<1x128xf32, #tpu.memory_space<vmem>>, %arg4: memref<1x128xf32, #tpu.memory_space<vmem>>, %arg5: memref<128x128xbf16, #tpu.memory_space<vmem>>, %arg6: memref<1x128xf32, #tpu.memory_space<vmem>>, %arg7: memref<512x128xf32, #tpu.memory_space<vmem>>) attributes {dimension_semantics = [#tpu.dimension_semantics<parallel>, #tpu.dimension_semantics<parallel>], iteration_bounds = array<i64: 1, 1>, scalar_prefetch = 0 : i64, scratch_operands = 0 : i64, tpu.core_type = #tpu.core_type<tc>, window_params = [{transform_indices = @transform_0, window_bounds = array<i64: 512, 128>}, {pipeline_mode = #tpu.pipeline_mode<synchronous>, transform_indices = @transform_1, window_bounds = array<i64: 1, 128>}, {pipeline_mode = #tpu.pipeline_mode<synchronous>, transform_indices = @transform_2, window_bounds = array<i64: 1, 128>}, {transform_indices = @transform_3, window_bounds = array<i64: 128, 128>}, {transform_indices = @transform_4, window_bounds = array<i64: 1, 128>}, {transform_indices = @transform_5, window_bounds = array<i64: 512, 128>}]} {
    %c0 = arith.constant 0 : index
    %c0_0 = arith.constant 0 : index
    %0 = vector.load %arg2[%c0, %c0_0] : memref<512x128xf32, #tpu.memory_space<vmem>>, vector<512x128xf32>
    %cst = arith.constant dense<0.000000e+00> : vector<512xf32>
    %1 = vector.multi_reduction <add>, %0, %cst [1] : vector<512x128xf32> to vector<512xf32>
    %2 = vector.shape_cast %1 : vector<512xf32> to vector<512x1xf32>
    %cst_1 = arith.constant 1.280000e+02 : f32
    %3 = vector.broadcast %cst_1 : f32 to vector<512x1xf32>
    %4 = arith.divf %2, %3 : vector<512x1xf32>
    %5 = vector.broadcast %4 : vector<512x1xf32> to vector<512x128xf32>
    %6 = arith.subf %0, %5 : vector<512x128xf32>
    %7 = arith.mulf %6, %6 : vector<512x128xf32>
    %cst_2 = arith.constant dense<0.000000e+00> : vector<512xf32>
    %8 = vector.multi_reduction <add>, %7, %cst_2 [1] : vector<512x128xf32> to vector<512xf32>
    %9 = vector.shape_cast %8 : vector<512xf32> to vector<512x1xf32>
    %cst_3 = arith.constant 1.280000e+02 : f32
    %10 = vector.broadcast %cst_3 : f32 to vector<512x1xf32>
    %11 = arith.divf %9, %10 : vector<512x1xf32>
    %cst_4 = arith.constant 9.99999974E-6 : f32
    %12 = vector.broadcast %cst_4 : f32 to vector<512x1xf32>
    %13 = arith.addf %11, %12 : vector<512x1xf32>
    %14 = math.rsqrt %13 : vector<512x1xf32>
    %c0_5 = arith.constant 0 : index
    %c0_6 = arith.constant 0 : index
    %15 = vector.load %arg3[%c0_5, %c0_6] : memref<1x128xf32, #tpu.memory_space<vmem>>, vector<1x128xf32>
    %c0_7 = arith.constant 0 : index
    %c0_8 = arith.constant 0 : index
    %16 = vector.load %arg4[%c0_7, %c0_8] : memref<1x128xf32, #tpu.memory_space<vmem>>, vector<1x128xf32>
    %17 = vector.broadcast %14 : vector<512x1xf32> to vector<512x128xf32>
    %18 = arith.mulf %6, %17 : vector<512x128xf32>
    %19 = vector.broadcast %15 : vector<1x128xf32> to vector<512x128xf32>
    %20 = arith.mulf %18, %19 : vector<512x128xf32>
    %21 = vector.broadcast %16 : vector<1x128xf32> to vector<512x128xf32>
    %22 = arith.addf %20, %21 : vector<512x128xf32>
    %23 = arith.truncf %22 : vector<512x128xf32> to vector<512x128xbf16>
    %c0_9 = arith.constant 0 : index
    %c0_10 = arith.constant 0 : index
    %24 = vector.load %arg5[%c0_9, %c0_10] : memref<128x128xbf16, #tpu.memory_space<vmem>>, vector<128x128xbf16>
    %cst_11 = arith.constant dense<0.000000e+00> : vector<512x128xf32>
    %25 = tpu.matmul %23, %24, %cst_11 {dimension_numbers = #tpu.dot_dimension_numbers<[1], [0], [0], [1], [0, 0, 1, 1], [], []>} : vector<512x128xbf16>, vector<128x128xbf16>, vector<512x128xf32> -> vector<512x128xf32>
    %c0_12 = arith.constant 0 : index
    %c0_13 = arith.constant 0 : index
    %26 = vector.load %arg6[%c0_12, %c0_13] : memref<1x128xf32, #tpu.memory_space<vmem>>, vector<1x128xf32>
    %27 = vector.broadcast %26 : vector<1x128xf32> to vector<512x128xf32>
    %28 = arith.addf %25, %27 : vector<512x128xf32>
    %c0_14 = arith.constant 0 : index
    %c0_15 = arith.constant 0 : index
    %29 = vector.load %arg7[%c0_14, %c0_15] : memref<512x128xf32, #tpu.memory_space<vmem>>, vector<512x128xf32>
    tpu.vector_store %arg7[%c0_14, %c0_15], %28 {strides = array<i32>} : memref<512x128xf32, #tpu.memory_space<vmem>>, vector<512x128xf32>,
    return
  }
  func.func @transform_0(%arg0: i32, %arg1: i32) -> (i32, i32) {
    %c0_i32 = arith.constant 0 : i32
    %c0_i32_0 = arith.constant 0 : i32
    return %arg1, %c0_i32 : i32, i32
  }
  func.func @transform_1(%arg0: i32, %arg1: i32) -> (i32, i32) {
    %c0_i32 = arith.constant 0 : i32
    %c0_i32_0 = arith.constant 0 : i32
    %c0_i32_1 = arith.constant 0 : i32
    return %c0_i32, %c0_i32_0 : i32, i32
  }
  func.func @transform_2(%arg0: i32, %arg1: i32) -> (i32, i32) {
    %c0_i32 = arith.constant 0 : i32
    %c0_i32_0 = arith.constant 0 : i32
    %c0_i32_1 = arith.constant 0 : i32
    return %c0_i32, %c0_i32_0 : i32, i32
  }
  func.func @transform_3(%arg0: i32, %arg1: i32) -> (i32, i32) {
    %c0_i32 = arith.constant 0 : i32
    %c0_i32_0 = arith.constant 0 : i32
    return %c0_i32, %arg0 : i32, i32
  }
  func.func @transform_4(%arg0: i32, %arg1: i32) -> (i32, i32) {
    %c0_i32 = arith.constant 0 : i32
    %c0_i32_0 = arith.constant 0 : i32
    return %c0_i32, %arg0 : i32, i32
  }
  func.func @transform_5(%arg0: i32, %arg1: i32) -> (i32, i32) {
    %c0_i32 = arith.constant 0 : i32
    return %arg1, %arg0 : i32, i32
  }
}

</mosaic_0001>

<llo_original>
// kernel: tpu_custom_call.1
$region0: #{tpu_custom_call.1}
  #allocation0 [shape = 'u32[]', space=smem, size = 0x4, offset = 0x4, fixed_abs, tag = 'smem constant byte address 0x4 - core index']
  #allocation1 [shape = 'u32[144,128]{1,0:T(1,128)}', space=vmem, size = 0x12000, scoped, tag = 'internal scratch']
  %s0 = inlined_call_operand.hbm [shape: f32[512,128], index: 0, kind: input, shape index: {}]
  %s1 = inlined_call_operand.vmem [shape: f32[1,128], index: 1, kind: input, shape index: {}]
  %s2 = inlined_call_operand.vmem [shape: f32[1,128], index: 2, kind: input, shape index: {}]
  %s3 = inlined_call_operand.hbm [shape: bf16[128,128], index: 3, kind: input, shape index: {}]
  %s4 = inlined_call_operand.vmem [shape: f32[1,128], index: 4, kind: input, shape index: {}]
  %s5 = inlined_call_operand.hbm [shape: f32[512,128], index: 5, kind: output, shape index: {}]
  %s6 = sld [smem:[#allocation0]]
  $region38: #{tpu_custom_call.1} parent=0
    _
  %s8 = ssub.s32 1, %s6
  %s9 = scalar_select 0, %s8, %s6
  $region1: #{tpu_custom_call.1} parent=0
    #allocation2 [shape = 'u8[262144]{0}', space=vmem, size = 0x40000, scoped, tag = 'input window, operand 0, single buffered']
    #allocation3 [shape = 's32[1]{0}', space=sflag, size = 0x4, scoped, tag = 'scoped memory for tpu_custom_call.1']
    #allocation4 [shape = 's32[1]{0}', space=sflag, size = 0x4, scoped, tag = 'scoped memory for tpu_custom_call.1']
    #allocation5 [shape = 'u8[32768]{0}', space=vmem, size = 0x8000, scoped, tag = 'input window, operand 3, single buffered']
    #allocation6 [shape = 's32[1]{0}', space=sflag, size = 0x4, scoped, tag = 'scoped memory for tpu_custom_call.1']
    #allocation7 [shape = 'u8[262144]{0}', space=vmem, size = 0x40000, scoped, tag = 'output window, operand 0, single buffered']
    %10 = vsyncpa [#allocation3], 0
    %11 = vsyncpa [#allocation6], 0
    %12 = vsyncpa [#allocation4], 0
    // Predicated region
    $region2: #{tpu_custom_call.1} parent=1 // pred_check
      _
    $region3: #{tpu_custom_call.1} parent=1 // pred_check_branch
      %14 = sbr.rel (0) target = $region5
    $region4: #{tpu_custom_call.1} parent=1 // pred_region
      %s16 = ssub.s32 8192, 8192
      %17 = vsyncadd [#allocation3], %s16
      %s18 = sshll.u32 [#allocation2], 4
      %s19 = int_to_ptr.vmem [resolvable:$true] %s18
      %24 = dma.hbm_to_vmem [thread:$0]  %s0, 8192, %s19, [#allocation3], 128, 128, 8
    $region5: #{tpu_custom_call.1} parent=1 // pred_fallthru
      _
    // Predicated region
    $region6: #{tpu_custom_call.1} parent=1 // pred_check
      _
    $region7: #{tpu_custom_call.1} parent=1 // pred_check_branch
      %26 = sbr.rel (0) target = $region9
    $region8: #{tpu_custom_call.1} parent=1 // pred_region
      _
    $region9: #{tpu_custom_call.1} parent=1 // pred_fallthru
      _
    // Predicated region
    $region10: #{tpu_custom_call.1} parent=1 // pred_check
      _
    $region11: #{tpu_custom_call.1} parent=1 // pred_check_branch
      %28 = sbr.rel (0) target = $region13
    $region12: #{tpu_custom_call.1} parent=1 // pred_region
      _
    $region13: #{tpu_custom_call.1} parent=1 // pred_fallthru
      _
    // Predicated region
    $region14: #{tpu_custom_call.1} parent=1 // pred_check
      _
    $region15: #{tpu_custom_call.1} parent=1 // pred_check_branch
      %30 = sbr.rel (0) target = $region17
    $region16: #{tpu_custom_call.1} parent=1 // pred_region
      %s32 = ssub.s32 1024, 1024
      %33 = vsyncadd [#allocation6], %s32
      %s34 = sshll.u32 [#allocation5], 4
      %s35 = int_to_ptr.vmem [resolvable:$true] %s34
      %40 = dma.hbm_to_vmem [thread:$0]  %s3, 1024, %s35, [#allocation6], 64, 64, 4
    $region17: #{tpu_custom_call.1} parent=1 // pred_fallthru
      _
    // Predicated region
    $region18: #{tpu_custom_call.1} parent=1 // pred_check
      _
    $region19: #{tpu_custom_call.1} parent=1 // pred_check_branch
      %42 = sbr.rel (0) target = $region21
    $region20: #{tpu_custom_call.1} parent=1 // pred_region
      _
    $region21: #{tpu_custom_call.1} parent=1 // pred_fallthru
      _
    // Predicated region
    $region22: #{tpu_custom_call.1} parent=1 // pred_check
      _
    $region23: #{tpu_custom_call.1} parent=1 // pred_check_branch
      %44 = sbr.rel (0) target = $region25
    $region24: #{tpu_custom_call.1} parent=1 // pred_region
      %45 = dma.done [#allocation3], 8192
    $region25: #{tpu_custom_call.1} parent=1 // pred_fallthru
      _
    // Predicated region
    $region26: #{tpu_custom_call.1} parent=1 // pred_check
      _
    $region27: #{tpu_custom_call.1} parent=1 // pred_check_branch
      %47 = sbr.rel (0) target = $region29
    $region28: #{tpu_custom_call.1} parent=1 // pred_region
      %48 = dma.done [#allocation6], 1024
    $region29: #{tpu_custom_call.1} parent=1 // pred_fallthru
      _
    %v50 = vld [vmem:[#allocation2] sm:$0xff]
    %v51 = vld [vmem:[#allocation2 + $0x8] sm:$0xff]
    %v52 = vld [vmem:[#allocation2 + $0x10] sm:$0xff]
    %v53 = vld [vmem:[#allocation2 + $0x18] sm:$0xff]
    %v54 = vld [vmem:[#allocation2 + $0x20] sm:$0xff]
    %v55 = vld [vmem:[#allocation2 + $0x28] sm:$0xff]
    %v56 = vld [vmem:[#allocation2 + $0x30] sm:$0xff]
    %v57 = vld [vmem:[#allocation2 + $0x38] sm:$0xff]
    %v58 = vld [vmem:[#allocation2 + $0x40] sm:$0xff]
    %v59 = vld [vmem:[#allocation2 + $0x48] sm:$0xff]
    %v60 = vld [vmem:[#allocation2 + $0x50] sm:$0xff]
    %v61 = vld [vmem:[#allocation2 + $0x58] sm:$0xff]
    %v62 = vld [vmem:[#allocation2 + $0x60] sm:$0xff]
    %v63 = vld [vmem:[#allocation2 + $0x68] sm:$0xff]
    %v64 = vld [vmem:[#allocation2 + $0x70] sm:$0xff]
    %v65 = vld [vmem:[#allocation2 + $0x78] sm:$0xff]
    %v66 = vld [vmem:[#allocation2 + $0x80] sm:$0xff]
    %v67 = vld [vmem:[#allocation2 + $0x88] sm:$0xff]
    %v68 = vld [vmem:[#allocation2 + $0x90] sm:$0xff]
    %v69 = vld [vmem:[#allocation2 + $0x98] sm:$0xff]
    %v70 = vld [vmem:[#allocation2 + $0xa0] sm:$0xff]
    %v71 = vld [vmem:[#allocation2 + $0xa8] sm:$0xff]
    %v72 = vld [vmem:[#allocation2 + $0xb0] sm:$0xff]
    %v73 = vld [vmem:[#allocation2 + $0xb8] sm:$0xff]
    %v74 = vld [vmem:[#allocation2 + $0xc0] sm:$0xff]
    %v75 = vld [vmem:[#allocation2 + $0xc8] sm:$0xff]
    %v76 = vld [vmem:[#allocation2 + $0xd0] sm:$0xff]
    %v77 = vld [vmem:[#allocation2 + $0xd8] sm:$0xff]
    %v78 = vld [vmem:[#allocation2 + $0xe0] sm:$0xff]
    %v79 = vld [vmem:[#allocation2 + $0xe8] sm:$0xff]
    %v80 = vld [vmem:[#allocation2 + $0xf0] sm:$0xff]
    %v81 = vld [vmem:[#allocation2 + $0xf8] sm:$0xff]
    %v82 = vld [vmem:[#allocation2 + $0x100] sm:$0xff]
    %v83 = vld [vmem:[#allocation2 + $0x108] sm:$0xff]
    %v84 = vld [vmem:[#allocation2 + $0x110] sm:$0xff]
    %v85 = vld [vmem:[#allocation2 + $0x118] sm:$0xff]
    %v86 = vld [vmem:[#allocation2 + $0x120] sm:$0xff]
    %v87 = vld [vmem:[#allocation2 + $0x128] sm:$0xff]
    %v88 = vld [vmem:[#allocation2 + $0x130] sm:$0xff]
    %v89 = vld [vmem:[#allocation2 + $0x138] sm:$0xff]
    %v90 = vld [vmem:[#allocation2 + $0x140] sm:$0xff]
    %v91 = vld [vmem:[#allocation2 + $0x148] sm:$0xff]
    %v92 = vld [vmem:[#allocation2 + $0x150] sm:$0xff]
    %v93 = vld [vmem:[#allocation2 + $0x158] sm:$0xff]
    %v94 = vld [vmem:[#allocation2 + $0x160] sm:$0xff]
    %v95 = vld [vmem:[#allocation2 + $0x168] sm:$0xff]
    %v96 = vld [vmem:[#allocation2 + $0x170] sm:$0xff]
    %v97 = vld [vmem:[#allocation2 + $0x178] sm:$0xff]
    %v98 = vld [vmem:[#allocation2 + $0x180] sm:$0xff]
    %v99 = vld [vmem:[#allocation2 + $0x188] sm:$0xff]
    %v100 = vld [vmem:[#allocation2 + $0x190] sm:$0xff]
    %v101 = vld [vmem:[#allocation2 + $0x198] sm:$0xff]
    %v102 = vld [vmem:[#allocation2 + $0x1a0] sm:$0xff]
    %v103 = vld [vmem:[#allocation2 + $0x1a8] sm:$0xff]
    %v104 = vld [vmem:[#allocation2 + $0x1b0] sm:$0xff]
    %v105 = vld [vmem:[#allocation2 + $0x1b8] sm:$0xff]
    %v106 = vld [vmem:[#allocation2 + $0x1c0] sm:$0xff]
    %v107 = vld [vmem:[#allocation2 + $0x1c8] sm:$0xff]
    %v108 = vld [vmem:[#allocation2 + $0x1d0] sm:$0xff]
    %v109 = vld [vmem:[#allocation2 + $0x1d8] sm:$0xff]
    %v110 = vld [vmem:[#allocation2 + $0x1e0] sm:$0xff]
    %v111 = vld [vmem:[#allocation2 + $0x1e8] sm:$0xff]
    %v112 = vld [vmem:[#allocation2 + $0x1f0] sm:$0xff]
    %v113 = vld [vmem:[#allocation2 + $0x1f8] sm:$0xff]
    %114 = vadd.xlane.f32.xlu0 %v50
    %v115 = vpop.xlane.xlu0 %114
    %116 = vadd.xlane.f32.xlu0 %v51
    %v117 = vpop.xlane.xlu0 %116
    %118 = vadd.xlane.f32.xlu0 %v52
    %v119 = vpop.xlane.xlu0 %118
    %120 = vadd.xlane.f32.xlu0 %v53
    %v121 = vpop.xlane.xlu0 %120
    %122 = vadd.xlane.f32.xlu0 %v54
    %v123 = vpop.xlane.xlu0 %122
    %124 = vadd.xlane.f32.xlu0 %v55
    %v125 = vpop.xlane.xlu0 %124
    %126 = vadd.xlane.f32.xlu0 %v56
    %v127 = vpop.xlane.xlu0 %126
    %128 = vadd.xlane.f32.xlu0 %v57
    %v129 = vpop.xlane.xlu0 %128
    %130 = vadd.xlane.f32.xlu0 %v58
    %v131 = vpop.xlane.xlu0 %130
    %132 = vadd.xlane.f32.xlu0 %v59
    %v133 = vpop.xlane.xlu0 %132
    %134 = vadd.xlane.f32.xlu0 %v60
    %v135 = vpop.xlane.xlu0 %134
    %136 = vadd.xlane.f32.xlu0 %v61
    %v137 = vpop.xlane.xlu0 %136
    %138 = vadd.xlane.f32.xlu0 %v62
    %v139 = vpop.xlane.xlu0 %138
    %140 = vadd.xlane.f32.xlu0 %v63
    %v141 = vpop.xlane.xlu0 %140
    %142 = vadd.xlane.f32.xlu0 %v64
    %v143 = vpop.xlane.xlu0 %142
    %144 = vadd.xlane.f32.xlu0 %v65
    %v145 = vpop.xlane.xlu0 %144
    %146 = vadd.xlane.f32.xlu0 %v66
    %v147 = vpop.xlane.xlu0 %146
    %148 = vadd.xlane.f32.xlu0 %v67
    %v149 = vpop.xlane.xlu0 %148
    %150 = vadd.xlane.f32.xlu0 %v68
    %v151 = vpop.xlane.xlu0 %150
    %152 = vadd.xlane.f32.xlu0 %v69
    %v153 = vpop.xlane.xlu0 %152
    %154 = vadd.xlane.f32.xlu0 %v70
    %v155 = vpop.xlane.xlu0 %154
    %156 = vadd.xlane.f32.xlu0 %v71
    %v157 = vpop.xlane.xlu0 %156
    %158 = vadd.xlane.f32.xlu0 %v72
    %v159 = vpop.xlane.xlu0 %158
    %160 = vadd.xlane.f32.xlu0 %v73
    %v161 = vpop.xlane.xlu0 %160
    %162 = vadd.xlane.f32.xlu0 %v74
    %v163 = vpop.xlane.xlu0 %162
    %164 = vadd.xlane.f32.xlu0 %v75
    %v165 = vpop.xlane.xlu0 %164
    %166 = vadd.xlane.f32.xlu0 %v76
    %v167 = vpop.xlane.xlu0 %166
    %168 = vadd.xlane.f32.xlu0 %v77
    %v169 = vpop.xlane.xlu0 %168
    %170 = vadd.xlane.f32.xlu0 %v78
    %v171 = vpop.xlane.xlu0 %170
    %172 = vadd.xlane.f32.xlu0 %v79
    %v173 = vpop.xlane.xlu0 %172
    %174 = vadd.xlane.f32.xlu0 %v80
    %v175 = vpop.xlane.xlu0 %174
    %176 = vadd.xlane.f32.xlu0 %v81
    %v177 = vpop.xlane.xlu0 %176
    %178 = vadd.xlane.f32.xlu0 %v82
    %v179 = vpop.xlane.xlu0 %178
    %180 = vadd.xlane.f32.xlu0 %v83
    %v181 = vpop.xlane.xlu0 %180
    %182 = vadd.xlane.f32.xlu0 %v84
    %v183 = vpop.xlane.xlu0 %182
    %184 = vadd.xlane.f32.xlu0 %v85
    %v185 = vpop.xlane.xlu0 %184
    %186 = vadd.xlane.f32.xlu0 %v86
    %v187 = vpop.xlane.xlu0 %186
    %188 = vadd.xlane.f32.xlu0 %v87
    %v189 = vpop.xlane.xlu0 %188
    %190 = vadd.xlane.f32.xlu0 %v88
    %v191 = vpop.xlane.xlu0 %190
    %192 = vadd.xlane.f32.xlu0 %v89
    %v193 = vpop.xlane.xlu0 %192
    %194 = vadd.xlane.f32.xlu0 %v90
    %v195 = vpop.xlane.xlu0 %194
    %196 = vadd.xlane.f32.xlu0 %v91
    %v197 = vpop.xlane.xlu0 %196
    %198 = vadd.xlane.f32.xlu0 %v92
    %v199 = vpop.xlane.xlu0 %198
    %200 = vadd.xlane.f32.xlu0 %v93
    %v201 = vpop.xlane.xlu0 %200
    %202 = vadd.xlane.f32.xlu0 %v94
    %v203 = vpop.xlane.xlu0 %202
    %204 = vadd.xlane.f32.xlu0 %v95
    %v205 = vpop.xlane.xlu0 %204
    %206 = vadd.xlane.f32.xlu0 %v96
    %v207 = vpop.xlane.xlu0 %206
    %208 = vadd.xlane.f32.xlu0 %v97
    %v209 = vpop.xlane.xlu0 %208
    %210 = vadd.xlane.f32.xlu0 %v98
    %v211 = vpop.xlane.xlu0 %210
    %212 = vadd.xlane.f32.xlu0 %v99
    %v213 = vpop.xlane.xlu0 %212
    %214 = vadd.xlane.f32.xlu0 %v100
    %v215 = vpop.xlane.xlu0 %214
    %216 = vadd.xlane.f32.xlu0 %v101
    %v217 = vpop.xlane.xlu0 %216
    %218 = vadd.xlane.f32.xlu0 %v102
    %v219 = vpop.xlane.xlu0 %218
    %220 = vadd.xlane.f32.xlu0 %v103
    %v221 = vpop.xlane.xlu0 %220
    %222 = vadd.xlane.f32.xlu0 %v104
    %v223 = vpop.xlane.xlu0 %222
    %224 = vadd.xlane.f32.xlu0 %v105
    %v225 = vpop.xlane.xlu0 %224
    %226 = vadd.xlane.f32.xlu0 %v106
    %v227 = vpop.xlane.xlu0 %226
    %228 = vadd.xlane.f32.xlu0 %v107
    %v229 = vpop.xlane.xlu0 %228
    %230 = vadd.xlane.f32.xlu0 %v108
    %v231 = vpop.xlane.xlu0 %230
    %232 = vadd.xlane.f32.xlu0 %v109
    %v233 = vpop.xlane.xlu0 %232
    %234 = vadd.xlane.f32.xlu0 %v110
    %v235 = vpop.xlane.xlu0 %234
    %236 = vadd.xlane.f32.xlu0 %v111
    %v237 = vpop.xlane.xlu0 %236
    %238 = vadd.xlane.f32.xlu0 %v112
    %v239 = vpop.xlane.xlu0 %238
    %240 = vadd.xlane.f32.xlu0 %v113
    %v241 = vpop.xlane.xlu0 %240
    %v242 = vrcp.pop 128.0
    %v243 = vmul.f32 %v115, %v242
    %v244 = vmul.f32 %v117, %v242
    %v245 = vmul.f32 %v119, %v242
    %v246 = vmul.f32 %v121, %v242
    %v247 = vmul.f32 %v123, %v242
    %v248 = vmul.f32 %v125, %v242
    %v249 = vmul.f32 %v127, %v242
    %v250 = vmul.f32 %v129, %v242
    %v251 = vmul.f32 %v131, %v242
    %v252 = vmul.f32 %v133, %v242
    %v253 = vmul.f32 %v135, %v242
    %v254 = vmul.f32 %v137, %v242
    %v255 = vmul.f32 %v139, %v242
    %v256 = vmul.f32 %v141, %v242
    %v257 = vmul.f32 %v143, %v242
    %v258 = vmul.f32 %v145, %v242
    %v259 = vmul.f32 %v147, %v242
    %v260 = vmul.f32 %v149, %v242
    %v261 = vmul.f32 %v151, %v242
    %v262 = vmul.f32 %v153, %v242
    %v263 = vmul.f32 %v155, %v242
    %v264 = vmul.f32 %v157, %v242
    %v265 = vmul.f32 %v159, %v242
    %v266 = vmul.f32 %v161, %v242
    %v267 = vmul.f32 %v163, %v242
    %v268 = vmul.f32 %v165, %v242
    %v269 = vmul.f32 %v167, %v242
    %v270 = vmul.f32 %v169, %v242
    %v271 = vmul.f32 %v171, %v242
    %v272 = vmul.f32 %v173, %v242
    %v273 = vmul.f32 %v175, %v242
    %v274 = vmul.f32 %v177, %v242
    %v275 = vmul.f32 %v179, %v242
    %v276 = vmul.f32 %v181, %v242
    %v277 = vmul.f32 %v183, %v242
    %v278 = vmul.f32 %v185, %v242
    %v279 = vmul.f32 %v187, %v242
    %v280 = vmul.f32 %v189, %v242
    %v281 = vmul.f32 %v191, %v242
    %v282 = vmul.f32 %v193, %v242
    %v283 = vmul.f32 %v195, %v242
    %v284 = vmul.f32 %v197, %v242
    %v285 = vmul.f32 %v199, %v242
    %v286 = vmul.f32 %v201, %v242
    %v287 = vmul.f32 %v203, %v242
    %v288 = vmul.f32 %v205, %v242
    %v289 = vmul.f32 %v207, %v242
    %v290 = vmul.f32 %v209, %v242
    %v291 = vmul.f32 %v211, %v242
    %v292 = vmul.f32 %v213, %v242
    %v293 = vmul.f32 %v215, %v242
    %v294 = vmul.f32 %v217, %v242
    %v295 = vmul.f32 %v219, %v242
    %v296 = vmul.f32 %v221, %v242
    %v297 = vmul.f32 %v223, %v242
    %v298 = vmul.f32 %v225, %v242
    %v299 = vmul.f32 %v227, %v242
    %v300 = vmul.f32 %v229, %v242
    %v301 = vmul.f32 %v231, %v242
    %v302 = vmul.f32 %v233, %v242
    %v303 = vmul.f32 %v235, %v242
    %v304 = vmul.f32 %v237, %v242
    %v305 = vmul.f32 %v239, %v242
    %v306 = vmul.f32 %v241, %v242
    %v307 = vsub.f32 %v50, %v243
    %v308 = vsub.f32 %v51, %v244
    %v309 = vsub.f32 %v52, %v245
    %v310 = vsub.f32 %v53, %v246
    %v311 = vsub.f32 %v54, %v247
    %v312 = vsub.f32 %v55, %v248
    %v313 = vsub.f32 %v56, %v249
    %v314 = vsub.f32 %v57, %v250
    %v315 = vsub.f32 %v58, %v251
    %v316 = vsub.f32 %v59, %v252
    %v317 = vsub.f32 %v60, %v253
    %v318 = vsub.f32 %v61, %v254
    %v319 = vsub.f32 %v62, %v255
    %v320 = vsub.f32 %v63, %v256
    %v321 = vsub.f32 %v64, %v257
    %v322 = vsub.f32 %v65, %v258
    %v323 = vsub.f32 %v66, %v259
    %v324 = vsub.f32 %v67, %v260
    %v325 = vsub.f32 %v68, %v261
    %v326 = vsub.f32 %v69, %v262
    %v327 = vsub.f32 %v70, %v263
    %v328 = vsub.f32 %v71, %v264
    %v329 = vsub.f32 %v72, %v265
    %v330 = vsub.f32 %v73, %v266
    %v331 = vsub.f32 %v74, %v267
    %v332 = vsub.f32 %v75, %v268
    %v333 = vsub.f32 %v76, %v269
    %v334 = vsub.f32 %v77, %v270
    %v335 = vsub.f32 %v78, %v271
    %v336 = vsub.f32 %v79, %v272
    %v337 = vsub.f32 %v80, %v273
    %v338 = vsub.f32 %v81, %v274
    %v339 = vsub.f32 %v82, %v275
    %v340 = vsub.f32 %v83, %v276
    %v341 = vsub.f32 %v84, %v277
    %v342 = vsub.f32 %v85, %v278
    %v343 = vsub.f32 %v86, %v279
    %v344 = vsub.f32 %v87, %v280
    %v345 = vsub.f32 %v88, %v281
    %v346 = vsub.f32 %v89, %v282
    %v347 = vsub.f32 %v90, %v283
    %v348 = vsub.f32 %v91, %v284
    %v349 = vsub.f32 %v92, %v285
    %v350 = vsub.f32 %v93, %v286
    %v351 = vsub.f32 %v94, %v287
    %v352 = vsub.f32 %v95, %v288
    %v353 = vsub.f32 %v96, %v289
    %v354 = vsub.f32 %v97, %v290
    %v355 = vsub.f32 %v98, %v291
    %v356 = vsub.f32 %v99, %v292
    %v357 = vsub.f32 %v100, %v293
    %v358 = vsub.f32 %v101, %v294
    %v359 = vsub.f32 %v102, %v295
    %v360 = vsub.f32 %v103, %v296
    %v361 = vsub.f32 %v104, %v297
    %v362 = vsub.f32 %v105, %v298
    %v363 = vsub.f32 %v106, %v299
    %v364 = vsub.f32 %v107, %v300
    %v365 = vsub.f32 %v108, %v301
    %v366 = vsub.f32 %v109, %v302
    %v367 = vsub.f32 %v110, %v303
    %v368 = vsub.f32 %v111, %v304
    %v369 = vsub.f32 %v112, %v305
    %v370 = vsub.f32 %v113, %v306
    %v371 = vmul.f32 %v307, %v307
    %v372 = vmul.f32 %v308, %v308
    %v373 = vmul.f32 %v309, %v309
    %v374 = vmul.f32 %v310, %v310
    %v375 = vmul.f32 %v311, %v311
    %v376 = vmul.f32 %v312, %v312
    %v377 = vmul.f32 %v313, %v313
    %v378 = vmul.f32 %v314, %v314
    %v379 = vmul.f32 %v315, %v315
    %v380 = vmul.f32 %v316, %v316
    %v381 = vmul.f32 %v317, %v317
    %v382 = vmul.f32 %v318, %v318
    %v383 = vmul.f32 %v319, %v319
    %v384 = vmul.f32 %v320, %v320
    %v385 = vmul.f32 %v321, %v321
    %v386 = vmul.f32 %v322, %v322
    %v387 = vmul.f32 %v323, %v323
    %v388 = vmul.f32 %v324, %v324
    %v389 = vmul.f32 %v325, %v325
    %v390 = vmul.f32 %v326, %v326
    %v391 = vmul.f32 %v327, %v327
    %v392 = vmul.f32 %v328, %v328
    %v393 = vmul.f32 %v329, %v329
    %v394 = vmul.f32 %v330, %v330
    %v395 = vmul.f32 %v331, %v331
    %v396 = vmul.f32 %v332, %v332
    %v397 = vmul.f32 %v333, %v333
    %v398 = vmul.f32 %v334, %v334
    %v399 = vmul.f32 %v335, %v335
    %v400 = vmul.f32 %v336, %v336
    %v401 = vmul.f32 %v337, %v337
    %v402 = vmul.f32 %v338, %v338
    %v403 = vmul.f32 %v339, %v339
    %v404 = vmul.f32 %v340, %v340
    %v405 = vmul.f32 %v341, %v341
    %v406 = vmul.f32 %v342, %v342
    %v407 = vmul.f32 %v343, %v343
    %v408 = vmul.f32 %v344, %v344
    %v409 = vmul.f32 %v345, %v345
    %v410 = vmul.f32 %v346, %v346
    %v411 = vmul.f32 %v347, %v347
    %v412 = vmul.f32 %v348, %v348
    %v413 = vmul.f32 %v349, %v349
    %v414 = vmul.f32 %v350, %v350
    %v415 = vmul.f32 %v351, %v351
    %v416 = vmul.f32 %v352, %v352
    %v417 = vmul.f32 %v353, %v353
    %v418 = vmul.f32 %v354, %v354
    %v419 = vmul.f32 %v355, %v355
    %v420 = vmul.f32 %v356, %v356
    %v421 = vmul.f32 %v357, %v357
    %v422 = vmul.f32 %v358, %v358
    %v423 = vmul.f32 %v359, %v359
    %v424 = vmul.f32 %v360, %v360
    %v425 = vmul.f32 %v361, %v361
    %v426 = vmul.f32 %v362, %v362
    %v427 = vmul.f32 %v363, %v363
    %v428 = vmul.f32 %v364, %v364
    %v429 = vmul.f32 %v365, %v365
    %v430 = vmul.f32 %v366, %v366
    %v431 = vmul.f32 %v367, %v367
    %v432 = vmul.f32 %v368, %v368
    %v433 = vmul.f32 %v369, %v369
    %v434 = vmul.f32 %v370, %v370
    %435 = vadd.xlane.f32.xlu0 %v371
    %v436 = vpop.xlane.xlu0 %435
    %437 = vadd.xlane.f32.xlu0 %v372
    %v438 = vpop.xlane.xlu0 %437
    %439 = vadd.xlane.f32.xlu0 %v373
    %v440 = vpop.xlane.xlu0 %439
    %441 = vadd.xlane.f32.xlu0 %v374
    %v442 = vpop.xlane.xlu0 %441
    %443 = vadd.xlane.f32.xlu0 %v375
    %v444 = vpop.xlane.xlu0 %443
    %445 = vadd.xlane.f32.xlu0 %v376
    %v446 = vpop.xlane.xlu0 %445
    %447 = vadd.xlane.f32.xlu0 %v377
    %v448 = vpop.xlane.xlu0 %447
    %449 = vadd.xlane.f32.xlu0 %v378
    %v450 = vpop.xlane.xlu0 %449
    %451 = vadd.xlane.f32.xlu0 %v379
    %v452 = vpop.xlane.xlu0 %451
    %453 = vadd.xlane.f32.xlu0 %v380
    %v454 = vpop.xlane.xlu0 %453
    %455 = vadd.xlane.f32.xlu0 %v381
    %v456 = vpop.xlane.xlu0 %455
    %457 = vadd.xlane.f32.xlu0 %v382
    %v458 = vpop.xlane.xlu0 %457
    %459 = vadd.xlane.f32.xlu0 %v383
    %v460 = vpop.xlane.xlu0 %459
    %461 = vadd.xlane.f32.xlu0 %v384
    %v462 = vpop.xlane.xlu0 %461
    %463 = vadd.xlane.f32.xlu0 %v385
    %v464 = vpop.xlane.xlu0 %463
    %465 = vadd.xlane.f32.xlu0 %v386
    %v466 = vpop.xlane.xlu0 %465
    %467 = vadd.xlane.f32.xlu0 %v387
    %v468 = vpop.xlane.xlu0 %467
    %469 = vadd.xlane.f32.xlu0 %v388
    %v470 = vpop.xlane.xlu0 %469
    %471 = vadd.xlane.f32.xlu0 %v389
    %v472 = vpop.xlane.xlu0 %471
    %473 = vadd.xlane.f32.xlu0 %v390
    %v474 = vpop.xlane.xlu0 %473
    %475 = vadd.xlane.f32.xlu0 %v391
    %v476 = vpop.xlane.xlu0 %475
    %477 = vadd.xlane.f32.xlu0 %v392
    %v478 = vpop.xlane.xlu0 %477
    %479 = vadd.xlane.f32.xlu0 %v393
    %v480 = vpop.xlane.xlu0 %479
    %481 = vadd.xlane.f32.xlu0 %v394
    %v482 = vpop.xlane.xlu0 %481
    %483 = vadd.xlane.f32.xlu0 %v395
    %v484 = vpop.xlane.xlu0 %483
    %485 = vadd.xlane.f32.xlu0 %v396
    %v486 = vpop.xlane.xlu0 %485
    %487 = vadd.xlane.f32.xlu0 %v397
    %v488 = vpop.xlane.xlu0 %487
    %489 = vadd.xlane.f32.xlu0 %v398
    %v490 = vpop.xlane.xlu0 %489
    %491 = vadd.xlane.f32.xlu0 %v399
    %v492 = vpop.xlane.xlu0 %491
    %493 = vadd.xlane.f32.xlu0 %v400
    %v494 = vpop.xlane.xlu0 %493
    %495 = vadd.xlane.f32.xlu0 %v401
    %v496 = vpop.xlane.xlu0 %495
    %497 = vadd.xlane.f32.xlu0 %v402
    %v498 = vpop.xlane.xlu0 %497
    %499 = vadd.xlane.f32.xlu0 %v403
    %v500 = vpop.xlane.xlu0 %499
    %501 = vadd.xlane.f32.xlu0 %v404
    %v502 = vpop.xlane.xlu0 %501
    %503 = vadd.xlane.f32.xlu0 %v405
    %v504 = vpop.xlane.xlu0 %503
    %505 = vadd.xlane.f32.xlu0 %v406
    %v506 = vpop.xlane.xlu0 %505
    %507 = vadd.xlane.f32.xlu0 %v407
    %v508 = vpop.xlane.xlu0 %507
    %509 = vadd.xlane.f32.xlu0 %v408
    %v510 = vpop.xlane.xlu0 %509
    %511 = vadd.xlane.f32.xlu0 %v409
    %v512 = vpop.xlane.xlu0 %511
    %513 = vadd.xlane.f32.xlu0 %v410
    %v514 = vpop.xlane.xlu0 %513
    %515 = vadd.xlane.f32.xlu0 %v411
    %v516 = vpop.xlane.xlu0 %515
    %517 = vadd.xlane.f32.xlu0 %v412
    %v518 = vpop.xlane.xlu0 %517
    %519 = vadd.xlane.f32.xlu0 %v413
    %v520 = vpop.xlane.xlu0 %519
    %521 = vadd.xlane.f32.xlu0 %v414
    %v522 = vpop.xlane.xlu0 %521
    %523 = vadd.xlane.f32.xlu0 %v415
    %v524 = vpop.xlane.xlu0 %523
    %525 = vadd.xlane.f32.xlu0 %v416
    %v526 = vpop.xlane.xlu0 %525
    %527 = vadd.xlane.f32.xlu0 %v417
    %v528 = vpop.xlane.xlu0 %527
    %529 = vadd.xlane.f32.xlu0 %v418
    %v530 = vpop.xlane.xlu0 %529
    %531 = vadd.xlane.f32.xlu0 %v419
    %v532 = vpop.xlane.xlu0 %531
    %533 = vadd.xlane.f32.xlu0 %v420
    %v534 = vpop.xlane.xlu0 %533
    %535 = vadd.xlane.f32.xlu0 %v421
    %v536 = vpop.xlane.xlu0 %535
    %537 = vadd.xlane.f32.xlu0 %v422
    %v538 = vpop.xlane.xlu0 %537
    %539 = vadd.xlane.f32.xlu0 %v423
    %v540 = vpop.xlane.xlu0 %539
    %541 = vadd.xlane.f32.xlu0 %v424
    %v542 = vpop.xlane.xlu0 %541
    %543 = vadd.xlane.f32.xlu0 %v425
    %v544 = vpop.xlane.xlu0 %543
    %545 = vadd.xlane.f32.xlu0 %v426
    %v546 = vpop.xlane.xlu0 %545
    %547 = vadd.xlane.f32.xlu0 %v427
    %v548 = vpop.xlane.xlu0 %547
    %549 = vadd.xlane.f32.xlu0 %v428
    %v550 = vpop.xlane.xlu0 %549
    %551 = vadd.xlane.f32.xlu0 %v429
    %v552 = vpop.xlane.xlu0 %551
    %553 = vadd.xlane.f32.xlu0 %v430
    %v554 = vpop.xlane.xlu0 %553
    %555 = vadd.xlane.f32.xlu0 %v431
    %v556 = vpop.xlane.xlu0 %555
    %557 = vadd.xlane.f32.xlu0 %v432
    %v558 = vpop.xlane.xlu0 %557
    %559 = vadd.xlane.f32.xlu0 %v433
    %v560 = vpop.xlane.xlu0 %559
    %561 = vadd.xlane.f32.xlu0 %v434
    %v562 = vpop.xlane.xlu0 %561
    %v563 = vmul.f32 %v436, %v242
    %v564 = vmul.f32 %v438, %v242
    %v565 = vmul.f32 %v440, %v242
    %v566 = vmul.f32 %v442, %v242
    %v567 = vmul.f32 %v444, %v242
    %v568 = vmul.f32 %v446, %v242
    %v569 = vmul.f32 %v448, %v242
    %v570 = vmul.f32 %v450, %v242
    %v571 = vmul.f32 %v452, %v242
    %v572 = vmul.f32 %v454, %v242
    %v573 = vmul.f32 %v456, %v242
    %v574 = vmul.f32 %v458, %v242
    %v575 = vmul.f32 %v460, %v242
    %v576 = vmul.f32 %v462, %v242
    %v577 = vmul.f32 %v464, %v242
    %v578 = vmul.f32 %v466, %v242
    %v579 = vmul.f32 %v468, %v242
    %v580 = vmul.f32 %v470, %v242
    %v581 = vmul.f32 %v472, %v242
    %v582 = vmul.f32 %v474, %v242
    %v583 = vmul.f32 %v476, %v242
    %v584 = vmul.f32 %v478, %v242
    %v585 = vmul.f32 %v480, %v242
    %v586 = vmul.f32 %v482, %v242
    %v587 = vmul.f32 %v484, %v242
    %v588 = vmul.f32 %v486, %v242
    %v589 = vmul.f32 %v488, %v242
    %v590 = vmul.f32 %v490, %v242
    %v591 = vmul.f32 %v492, %v242
    %v592 = vmul.f32 %v494, %v242
    %v593 = vmul.f32 %v496, %v242
    %v594 = vmul.f32 %v498, %v242
    %v595 = vmul.f32 %v500, %v242
    %v596 = vmul.f32 %v502, %v242
    %v597 = vmul.f32 %v504, %v242
    %v598 = vmul.f32 %v506, %v242
    %v599 = vmul.f32 %v508, %v242
    %v600 = vmul.f32 %v510, %v242
    %v601 = vmul.f32 %v512, %v242
    %v602 = vmul.f32 %v514, %v242
    %v603 = vmul.f32 %v516, %v242
    %v604 = vmul.f32 %v518, %v242
    %v605 = vmul.f32 %v520, %v242
    %v606 = vmul.f32 %v522, %v242
    %v607 = vmul.f32 %v524, %v242
    %v608 = vmul.f32 %v526, %v242
    %v609 = vmul.f32 %v528, %v242
    %v610 = vmul.f32 %v530, %v242
    %v611 = vmul.f32 %v532, %v242
    %v612 = vmul.f32 %v534, %v242
    %v613 = vmul.f32 %v536, %v242
    %v614 = vmul.f32 %v538, %v242
    %v615 = vmul.f32 %v540, %v242
    %v616 = vmul.f32 %v542, %v242
    %v617 = vmul.f32 %v544, %v242
    %v618 = vmul.f32 %v546, %v242
    %v619 = vmul.f32 %v548, %v242
    %v620 = vmul.f32 %v550, %v242
    %v621 = vmul.f32 %v552, %v242
    %v622 = vmul.f32 %v554, %v242
    %v623 = vmul.f32 %v556, %v242
    %v624 = vmul.f32 %v558, %v242
    %v625 = vmul.f32 %v560, %v242
    %v626 = vmul.f32 %v562, %v242
    %v627 = vadd.f32 %v563, 1e-05
    %v628 = vadd.f32 %v564, 1e-05
    %v629 = vadd.f32 %v565, 1e-05
    %v630 = vadd.f32 %v566, 1e-05
    %v631 = vadd.f32 %v567, 1e-05
    %v632 = vadd.f32 %v568, 1e-05
    %v633 = vadd.f32 %v569, 1e-05
    %v634 = vadd.f32 %v570, 1e-05
    %v635 = vadd.f32 %v571, 1e-05
    %v636 = vadd.f32 %v572, 1e-05
    %v637 = vadd.f32 %v573, 1e-05
    %v638 = vadd.f32 %v574, 1e-05
    %v639 = vadd.f32 %v575, 1e-05
    %v640 = vadd.f32 %v576, 1e-05
    %v641 = vadd.f32 %v577, 1e-05
    %v642 = vadd.f32 %v578, 1e-05
    %v643 = vadd.f32 %v579, 1e-05
    %v644 = vadd.f32 %v580, 1e-05
    %v645 = vadd.f32 %v581, 1e-05
    %v646 = vadd.f32 %v582, 1e-05
    %v647 = vadd.f32 %v583, 1e-05
    %v648 = vadd.f32 %v584, 1e-05
    %v649 = vadd.f32 %v585, 1e-05
    %v650 = vadd.f32 %v586, 1e-05
    %v651 = vadd.f32 %v587, 1e-05
    %v652 = vadd.f32 %v588, 1e-05
    %v653 = vadd.f32 %v589, 1e-05
    %v654 = vadd.f32 %v590, 1e-05
    %v655 = vadd.f32 %v591, 1e-05
    %v656 = vadd.f32 %v592, 1e-05
    %v657 = vadd.f32 %v593, 1e-05
    %v658 = vadd.f32 %v594, 1e-05
    %v659 = vadd.f32 %v595, 1e-05
    %v660 = vadd.f32 %v596, 1e-05
    %v661 = vadd.f32 %v597, 1e-05
    %v662 = vadd.f32 %v598, 1e-05
    %v663 = vadd.f32 %v599, 1e-05
    %v664 = vadd.f32 %v600, 1e-05
    %v665 = vadd.f32 %v601, 1e-05
    %v666 = vadd.f32 %v602, 1e-05
    %v667 = vadd.f32 %v603, 1e-05
    %v668 = vadd.f32 %v604, 1e-05
    %v669 = vadd.f32 %v605, 1e-05
    %v670 = vadd.f32 %v606, 1e-05
    %v671 = vadd.f32 %v607, 1e-05
    %v672 = vadd.f32 %v608, 1e-05
    %v673 = vadd.f32 %v609, 1e-05
    %v674 = vadd.f32 %v610, 1e-05
    %v675 = vadd.f32 %v611, 1e-05
    %v676 = vadd.f32 %v612, 1e-05
    %v677 = vadd.f32 %v613, 1e-05
    %v678 = vadd.f32 %v614, 1e-05
    %v679 = vadd.f32 %v615, 1e-05
    %v680 = vadd.f32 %v616, 1e-05
    %v681 = vadd.f32 %v617, 1e-05
    %v682 = vadd.f32 %v618, 1e-05
    %v683 = vadd.f32 %v619, 1e-05
    %v684 = vadd.f32 %v620, 1e-05
    %v685 = vadd.f32 %v621, 1e-05
    %v686 = vadd.f32 %v622, 1e-05
    %v687 = vadd.f32 %v623, 1e-05
    %v688 = vadd.f32 %v624, 1e-05
    %v689 = vadd.f32 %v625, 1e-05
    %v690 = vadd.f32 %v626, 1e-05
    %v691 = vrsqrt.pop %v627
    %v692 = vrsqrt.pop %v628
    %v693 = vrsqrt.pop %v629
    %v694 = vrsqrt.pop %v630
    %v695 = vrsqrt.pop %v631
    %v696 = vrsqrt.pop %v632
    %v697 = vrsqrt.pop %v633
    %v698 = vrsqrt.pop %v634
    %v699 = vrsqrt.pop %v635
    %v700 = vrsqrt.pop %v636
    %v701 = vrsqrt.pop %v637
    %v702 = vrsqrt.pop %v638
    %v703 = vrsqrt.pop %v639
    %v704 = vrsqrt.pop %v640
    %v705 = vrsqrt.pop %v641
    %v706 = vrsqrt.pop %v642
    %v707 = vrsqrt.pop %v643
    %v708 = vrsqrt.pop %v644
    %v709 = vrsqrt.pop %v645
    %v710 = vrsqrt.pop %v646
    %v711 = vrsqrt.pop %v647
    %v712 = vrsqrt.pop %v648
    %v713 = vrsqrt.pop %v649
    %v714 = vrsqrt.pop %v650
    %v715 = vrsqrt.pop %v651
    %v716 = vrsqrt.pop %v652
    %v717 = vrsqrt.pop %v653
    %v718 = vrsqrt.pop %v654
    %v719 = vrsqrt.pop %v655
    %v720 = vrsqrt.pop %v656
    %v721 = vrsqrt.pop %v657
    %v722 = vrsqrt.pop %v658
    %v723 = vrsqrt.pop %v659
    %v724 = vrsqrt.pop %v660
    %v725 = vrsqrt.pop %v661
    %v726 = vrsqrt.pop %v662
    %v727 = vrsqrt.pop %v663
    %v728 = vrsqrt.pop %v664
    %v729 = vrsqrt.pop %v665
    %v730 = vrsqrt.pop %v666
    %v731 = vrsqrt.pop %v667
    %v732 = vrsqrt.pop %v668
    %v733 = vrsqrt.pop %v669
    %v734 = vrsqrt.pop %v670
    %v735 = vrsqrt.pop %v671
    %v736 = vrsqrt.pop %v672
    %v737 = vrsqrt.pop %v673
    %v738 = vrsqrt.pop %v674
    %v739 = vrsqrt.pop %v675
    %v740 = vrsqrt.pop %v676
    %v741 = vrsqrt.pop %v677
    %v742 = vrsqrt.pop %v678
    %v743 = vrsqrt.pop %v679
    %v744 = vrsqrt.pop %v680
    %v745 = vrsqrt.pop %v681
    %v746 = vrsqrt.pop %v682
    %v747 = vrsqrt.pop %v683
    %v748 = vrsqrt.pop %v684
    %v749 = vrsqrt.pop %v685
    %v750 = vrsqrt.pop %v686
    %v751 = vrsqrt.pop %v687
    %v752 = vrsqrt.pop %v688
    %v753 = vrsqrt.pop %v689
    %v754 = vrsqrt.pop %v690
    %v755 = vld [vmem:[%s1] sm:$0x1]
    %v756 = vld [vmem:[%s2] sm:$0x1]
    %v757 = vmul.f32 %v307, %v691
    %v758 = vmul.f32 %v308, %v692
    %v759 = vmul.f32 %v309, %v693
    %v760 = vmul.f32 %v310, %v694
    %v761 = vmul.f32 %v311, %v695
    %v762 = vmul.f32 %v312, %v696
    %v763 = vmul.f32 %v313, %v697
    %v764 = vmul.f32 %v314, %v698
    %v765 = vmul.f32 %v315, %v699
    %v766 = vmul.f32 %v316, %v700
    %v767 = vmul.f32 %v317, %v701
    %v768 = vmul.f32 %v318, %v702
    %v769 = vmul.f32 %v319, %v703
    %v770 = vmul.f32 %v320, %v704
    %v771 = vmul.f32 %v321, %v705
    %v772 = vmul.f32 %v322, %v706
    %v773 = vmul.f32 %v323, %v707
    %v774 = vmul.f32 %v324, %v708
    %v775 = vmul.f32 %v325, %v709
    %v776 = vmul.f32 %v326, %v710
    %v777 = vmul.f32 %v327, %v711
    %v778 = vmul.f32 %v328, %v712
    %v779 = vmul.f32 %v329, %v713
    %v780 = vmul.f32 %v330, %v714
    %v781 = vmul.f32 %v331, %v715
    %v782 = vmul.f32 %v332, %v716
    %v783 = vmul.f32 %v333, %v717
    %v784 = vmul.f32 %v334, %v718
    %v785 = vmul.f32 %v335, %v719
    %v786 = vmul.f32 %v336, %v720
    %v787 = vmul.f32 %v337, %v721
    %v788 = vmul.f32 %v338, %v722
    %v789 = vmul.f32 %v339, %v723
    %v790 = vmul.f32 %v340, %v724
    %v791 = vmul.f32 %v341, %v725
    %v792 = vmul.f32 %v342, %v726
    %v793 = vmul.f32 %v343, %v727
    %v794 = vmul.f32 %v344, %v728
    %v795 = vmul.f32 %v345, %v729
    %v796 = vmul.f32 %v346, %v730
    %v797 = vmul.f32 %v347, %v731
    %v798 = vmul.f32 %v348, %v732
    %v799 = vmul.f32 %v349, %v733
    %v800 = vmul.f32 %v350, %v734
    %v801 = vmul.f32 %v351, %v735
    %v802 = vmul.f32 %v352, %v736
    %v803 = vmul.f32 %v353, %v737
    %v804 = vmul.f32 %v354, %v738
    %v805 = vmul.f32 %v355, %v739
    %v806 = vmul.f32 %v356, %v740
    %v807 = vmul.f32 %v357, %v741
    %v808 = vmul.f32 %v358, %v742
    %v809 = vmul.f32 %v359, %v743
    %v810 = vmul.f32 %v360, %v744
    %v811 = vmul.f32 %v361, %v745
    %v812 = vmul.f32 %v362, %v746
    %v813 = vmul.f32 %v363, %v747
    %v814 = vmul.f32 %v364, %v748
    %v815 = vmul.f32 %v365, %v749
    %v816 = vmul.f32 %v366, %v750
    %v817 = vmul.f32 %v367, %v751
    %v818 = vmul.f32 %v368, %v752
    %v819 = vmul.f32 %v369, %v753
    %v820 = vmul.f32 %v370, %v754
    %v822 = vlaneseq
    %v823 = vshrl.u32 %v822, 7
    %v824 = vsub.s32 0, %v823
    %v825 = vrot.slane %v755, %v824
    %v827 = vmul.f32 %v757, %v825
    %v828 = vmul.f32 %v758, %v825
    %v829 = vmul.f32 %v759, %v825
    %v830 = vmul.f32 %v760, %v825
    %v831 = vmul.f32 %v761, %v825
    %v832 = vmul.f32 %v762, %v825
    %v833 = vmul.f32 %v763, %v825
    %v834 = vmul.f32 %v764, %v825
    %v835 = vmul.f32 %v765, %v825
    %v836 = vmul.f32 %v766, %v825
    %v837 = vmul.f32 %v767, %v825
    %v838 = vmul.f32 %v768, %v825
    %v839 = vmul.f32 %v769, %v825
    %v840 = vmul.f32 %v770, %v825
    %v841 = vmul.f32 %v771, %v825
    %v842 = vmul.f32 %v772, %v825
    %v843 = vmul.f32 %v773, %v825
    %v844 = vmul.f32 %v774, %v825
    %v845 = vmul.f32 %v775, %v825
    %v846 = vmul.f32 %v776, %v825
    %v847 = vmul.f32 %v777, %v825
    %v848 = vmul.f32 %v778, %v825
    %v849 = vmul.f32 %v779, %v825
    %v850 = vmul.f32 %v780, %v825
    %v851 = vmul.f32 %v781, %v825
    %v852 = vmul.f32 %v782, %v825
    %v853 = vmul.f32 %v783, %v825
    %v854 = vmul.f32 %v784, %v825
    %v855 = vmul.f32 %v785, %v825
    %v856 = vmul.f32 %v786, %v825
    %v857 = vmul.f32 %v787, %v825
    %v858 = vmul.f32 %v788, %v825
    %v859 = vmul.f32 %v789, %v825
    %v860 = vmul.f32 %v790, %v825
    %v861 = vmul.f32 %v791, %v825
    %v862 = vmul.f32 %v792, %v825
    %v863 = vmul.f32 %v793, %v825
    %v864 = vmul.f32 %v794, %v825
    %v865 = vmul.f32 %v795, %v825
    %v866 = vmul.f32 %v796, %v825
    %v867 = vmul.f32 %v797, %v825
    %v868 = vmul.f32 %v798, %v825
    %v869 = vmul.f32 %v799, %v825
    %v870 = vmul.f32 %v800, %v825
    %v871 = vmul.f32 %v801, %v825
    %v872 = vmul.f32 %v802, %v825
    %v873 = vmul.f32 %v803, %v825
    %v874 = vmul.f32 %v804, %v825
    %v875 = vmul.f32 %v805, %v825
    %v876 = vmul.f32 %v806, %v825
    %v877 = vmul.f32 %v807, %v825
    %v878 = vmul.f32 %v808, %v825
    %v879 = vmul.f32 %v809, %v825
    %v880 = vmul.f32 %v810, %v825
    %v881 = vmul.f32 %v811, %v825
    %v882 = vmul.f32 %v812, %v825
    %v883 = vmul.f32 %v813, %v825
    %v884 = vmul.f32 %v814, %v825
    %v885 = vmul.f32 %v815, %v825
    %v886 = vmul.f32 %v816, %v825
    %v887 = vmul.f32 %v817, %v825
    %v888 = vmul.f32 %v818, %v825
    %v889 = vmul.f32 %v819, %v825
    %v890 = vmul.f32 %v820, %v825
    %v892 = vlaneseq
    %v893 = vshrl.u32 %v892, 7
    %v894 = vsub.s32 0, %v893
    %v895 = vrot.slane %v756, %v894
    %v897 = vadd.f32 %v827, %v895
    %v898 = vadd.f32 %v828, %v895
    %v899 = vadd.f32 %v829, %v895
    %v900 = vadd.f32 %v830, %v895
    %v901 = vadd.f32 %v831, %v895
    %v902 = vadd.f32 %v832, %v895
    %v903 = vadd.f32 %v833, %v895
    %v904 = vadd.f32 %v834, %v895
    %v905 = vadd.f32 %v835, %v895
    %v906 = vadd.f32 %v836, %v895
    %v907 = vadd.f32 %v837, %v895
    %v908 = vadd.f32 %v838, %v895
    %v909 = vadd.f32 %v839, %v895
    %v910 = vadd.f32 %v840, %v895
    %v911 = vadd.f32 %v841, %v895
    %v912 = vadd.f32 %v842, %v895
    %v913 = vadd.f32 %v843, %v895
    %v914 = vadd.f32 %v844, %v895
    %v915 = vadd.f32 %v845, %v895
    %v916 = vadd.f32 %v846, %v895
    %v917 = vadd.f32 %v847, %v895
    %v918 = vadd.f32 %v848, %v895
    %v919 = vadd.f32 %v849, %v895
    %v920 = vadd.f32 %v850, %v895
    %v921 = vadd.f32 %v851, %v895
    %v922 = vadd.f32 %v852, %v895
    %v923 = vadd.f32 %v853, %v895
    %v924 = vadd.f32 %v854, %v895
    %v925 = vadd.f32 %v855, %v895
    %v926 = vadd.f32 %v856, %v895
    %v927 = vadd.f32 %v857, %v895
    %v928 = vadd.f32 %v858, %v895
    %v929 = vadd.f32 %v859, %v895
    %v930 = vadd.f32 %v860, %v895
    %v931 = vadd.f32 %v861, %v895
    %v932 = vadd.f32 %v862, %v895
    %v933 = vadd.f32 %v863, %v895
    %v934 = vadd.f32 %v864, %v895
    %v935 = vadd.f32 %v865, %v895
    %v936 = vadd.f32 %v866, %v895
    %v937 = vadd.f32 %v867, %v895
    %v938 = vadd.f32 %v868, %v895
    %v939 = vadd.f32 %v869, %v895
    %v940 = vadd.f32 %v870, %v895
    %v941 = vadd.f32 %v871, %v895
    %v942 = vadd.f32 %v872, %v895
    %v943 = vadd.f32 %v873, %v895
    %v944 = vadd.f32 %v874, %v895
    %v945 = vadd.f32 %v875, %v895
    %v946 = vadd.f32 %v876, %v895
    %v947 = vadd.f32 %v877, %v895
    %v948 = vadd.f32 %v878, %v895
    %v949 = vadd.f32 %v879, %v895
    %v950 = vadd.f32 %v880, %v895
    %v951 = vadd.f32 %v881, %v895
    %v952 = vadd.f32 %v882, %v895
    %v953 = vadd.f32 %v883, %v895
    %v954 = vadd.f32 %v884, %v895
    %v955 = vadd.f32 %v885, %v895
    %v956 = vadd.f32 %v886, %v895
    %v957 = vadd.f32 %v887, %v895
    %v958 = vadd.f32 %v888, %v895
    %v959 = vadd.f32 %v889, %v895
    %v960 = vadd.f32 %v890, %v895
    %v961 = vpack.c.bf16 %v898, %v897
    %v962 = vpack.c.bf16 %v900, %v899
    %v963 = vpack.c.bf16 %v902, %v901
    %v964 = vpack.c.bf16 %v904, %v903
    %v965 = vpack.c.bf16 %v906, %v905
    %v966 = vpack.c.bf16 %v908, %v907
    %v967 = vpack.c.bf16 %v910, %v909
    %v968 = vpack.c.bf16 %v912, %v911
    %v969 = vpack.c.bf16 %v914, %v913
    %v970 = vpack.c.bf16 %v916, %v915
    %v971 = vpack.c.bf16 %v918, %v917
    %v972 = vpack.c.bf16 %v920, %v919
    %v973 = vpack.c.bf16 %v922, %v921
    %v974 = vpack.c.bf16 %v924, %v923
    %v975 = vpack.c.bf16 %v926, %v925
    %v976 = vpack.c.bf16 %v928, %v927
    %v977 = vpack.c.bf16 %v930, %v929
    %v978 = vpack.c.bf16 %v932, %v931
    %v979 = vpack.c.bf16 %v934, %v933
    %v980 = vpack.c.bf16 %v936, %v935
    %v981 = vpack.c.bf16 %v938, %v937
    %v982 = vpack.c.bf16 %v940, %v939
    %v983 = vpack.c.bf16 %v942, %v941
    %v984 = vpack.c.bf16 %v944, %v943
    %v985 = vpack.c.bf16 %v946, %v945
    %v986 = vpack.c.bf16 %v948, %v947
    %v987 = vpack.c.bf16 %v950, %v949
    %v988 = vpack.c.bf16 %v952, %v951
    %v989 = vpack.c.bf16 %v954, %v953
    %v990 = vpack.c.bf16 %v956, %v955
    %v991 = vpack.c.bf16 %v958, %v957
    %v992 = vpack.c.bf16 %v960, %v959
    %v993 = vld [vmem:[#allocation5] sm:$0xf]
    %v994 = vld [vmem:[#allocation5 + $0x4] sm:$0xf]
    %v995 = vld [vmem:[#allocation5 + $0x8] sm:$0xf]
    %v996 = vld [vmem:[#allocation5 + $0xc] sm:$0xf]
    %v997 = vld [vmem:[#allocation5 + $0x10] sm:$0xf]
    %v998 = vld [vmem:[#allocation5 + $0x14] sm:$0xf]
    %v999 = vld [vmem:[#allocation5 + $0x18] sm:$0xf]
    %v1000 = vld [vmem:[#allocation5 + $0x1c] sm:$0xf]
    %v1001 = vld [vmem:[#allocation5 + $0x20] sm:$0xf]
    %v1002 = vld [vmem:[#allocation5 + $0x24] sm:$0xf]
    %v1003 = vld [vmem:[#allocation5 + $0x28] sm:$0xf]
    %v1004 = vld [vmem:[#allocation5 + $0x2c] sm:$0xf]
    %v1005 = vld [vmem:[#allocation5 + $0x30] sm:$0xf]
    %v1006 = vld [vmem:[#allocation5 + $0x34] sm:$0xf]
    %v1007 = vld [vmem:[#allocation5 + $0x38] sm:$0xf]
    %v1008 = vld [vmem:[#allocation5 + $0x3c] sm:$0xf]
    %v1009 = vld [vmem:[%s4] sm:$0x1]
    %v1011 = vlaneseq
    %v1012 = vshrl.u32 %v1011, 7
    %v1013 = vsub.s32 0, %v1012
    %v1014 = vrot.slane %v1009, %v1013
    %v1032 = vunpack.c.l.b16 %v993
    %v1033 = vunpack.c.l.b16 %v994
    %v1034 = vunpack.c.l.b16 %v995
    %v1035 = vunpack.c.l.b16 %v996
    %v1036 = vunpack.c.l.b16 %v997
    %v1037 = vunpack.c.l.b16 %v998
    %v1038 = vunpack.c.l.b16 %v999
    %v1039 = vunpack.c.l.b16 %v1000
    %v1040 = vunpack.c.l.b16 %v1001
    %v1041 = vunpack.c.l.b16 %v1002
    %v1042 = vunpack.c.l.b16 %v1003
    %v1043 = vunpack.c.l.b16 %v1004
    %v1044 = vunpack.c.l.b16 %v1005
    %v1045 = vunpack.c.l.b16 %v1006
    %v1046 = vunpack.c.l.b16 %v1007
    %v1047 = vunpack.c.l.b16 %v1008
    %v1048 = vpack.c.b16 %v1033, %v1032
    %v1049 = vpack.c.b16 %v1035, %v1034
    %v1050 = vpack.c.b16 %v1037, %v1036
    %v1051 = vpack.c.b16 %v1039, %v1038
    %v1052 = vpack.c.b16 %v1041, %v1040
    %v1053 = vpack.c.b16 %v1043, %v1042
    %v1054 = vpack.c.b16 %v1045, %v1044
    %v1055 = vpack.c.b16 %v1047, %v1046
    %1064 = vmatprep.subr.bf16.mxu0 0
    %1065 = vmatpush1.bf16.msra.mxu0 %v1048
    %1066 = vmatprep.subr.bf16.mxu0 0
    %1067 = vmatpush1.bf16.msra.mxu0 %v1049
    %1068 = vmatprep.subr.bf16.mxu0 0
    %1069 = vmatpush1.bf16.msra.mxu0 %v1050
    %1070 = vmatprep.subr.bf16.mxu0 0
    %1071 = vmatpush1.bf16.msra.mxu0 %v1051
    %1072 = vmatprep.subr.bf16.mxu0 0
    %1073 = vmatpush1.bf16.msra.mxu0 %v1052
    %1074 = vmatprep.subr.bf16.mxu0 0
    %1075 = vmatpush1.bf16.msra.mxu0 %v1053
    %1076 = vmatprep.subr.bf16.mxu0 0
    %1077 = vmatpush1.bf16.msra.mxu0 %v1054
    %1078 = vmatprep.subr.bf16.mxu0 0
    %1079 = vmatpush1.bf16.msra.mxu0 %v1055
    %1080 = vmatprep.subr.bf16.mxu0 0
    %1081 = vmatpush1.bf16.msra.mxu0 0
    %1082 = vmatprep.subr.bf16.mxu0 0
    %1083 = vmatpush1.bf16.msra.mxu0 0
    %1084 = vmatprep.subr.bf16.mxu0 0
    %1085 = vmatpush1.bf16.msra.mxu0 0
    %1086 = vmatprep.subr.bf16.mxu0 0
    %1087 = vmatpush1.bf16.msra.mxu0 0
    %1088 = vmatprep.subr.bf16.mxu0 0
    %1089 = vmatpush1.bf16.msra.mxu0 0
    %1090 = vmatprep.subr.bf16.mxu0 0
    %1091 = vmatpush1.bf16.msra.mxu0 0
    %1092 = vmatprep.subr.bf16.mxu0 0
    %1093 = vmatpush1.bf16.msra.mxu0 0
    %1094 = vmatprep.subr.bf16.mxu0 0
    %1095 = vmatpush1.bf16.msra.mxu0 0
    %1096 = vmatprep.mubr.bf16.mxu0 0
    %1097 = vmatmul.mubr.bf16.gmra.mrb[0].mxu0 %v961
    %v1098 = vpop.f32.mrb[0].mxu0
    %v1099 = vadd.f32 %v1014, %v1098
    %v1100 = vpop.f32.mrb[0].mxu0
    %v1101 = vpop.f32.mrb[0].mxu0
    %v1102 = vadd.f32 %v1014, %v1101
    %v1103 = vpop.f32.mrb[0].mxu0
    %1104 = vmatprep.mubr.bf16.mxu0 0
    %1105 = vmatmul.mubr.bf16.gmra.mrb[0].mxu0 %v962
    %v1106 = vpop.f32.mrb[0].mxu0
    %v1107 = vadd.f32 %v1014, %v1106
    %v1108 = vpop.f32.mrb[0].mxu0
    %v1109 = vpop.f32.mrb[0].mxu0
    %v1110 = vadd.f32 %v1014, %v1109
    %v1111 = vpop.f32.mrb[0].mxu0
    %1112 = vmatprep.mubr.bf16.mxu0 0
    %1113 = vmatmul.mubr.bf16.gmra.mrb[0].mxu0 %v963
    %v1114 = vpop.f32.mrb[0].mxu0
    %v1115 = vadd.f32 %v1014, %v1114
    %v1116 = vpop.f32.mrb[0].mxu0
    %v1117 = vpop.f32.mrb[0].mxu0
    %v1118 = vadd.f32 %v1014, %v1117
    %v1119 = vpop.f32.mrb[0].mxu0
    %1120 = vmatprep.mubr.bf16.mxu0 0
    %1121 = vmatmul.mubr.bf16.gmra.mrb[0].mxu0 %v964
    %v1122 = vpop.f32.mrb[0].mxu0
    %v1123 = vadd.f32 %v1014, %v1122
    %v1124 = vpop.f32.mrb[0].mxu0
    %v1125 = vpop.f32.mrb[0].mxu0
    %v1126 = vadd.f32 %v1014, %v1125
    %v1127 = vpop.f32.mrb[0].mxu0
    %1128 = vmatprep.mubr.bf16.mxu0 0
    %1129 = vmatmul.mubr.bf16.gmra.mrb[0].mxu0 %v965
    %v1130 = vpop.f32.mrb[0].mxu0
    %v1131 = vadd.f32 %v1014, %v1130
    %v1132 = vpop.f32.mrb[0].mxu0
    %v1133 = vpop.f32.mrb[0].mxu0
    %v1134 = vadd.f32 %v1014, %v1133
    %v1135 = vpop.f32.mrb[0].mxu0
    %1136 = vmatprep.mubr.bf16.mxu0 0
    %1137 = vmatmul.mubr.bf16.gmra.mrb[0].mxu0 %v966
    %v1138 = vpop.f32.mrb[0].mxu0
    %v1139 = vadd.f32 %v1014, %v1138
    %v1140 = vpop.f32.mrb[0].mxu0
    %v1141 = vpop.f32.mrb[0].mxu0
    %v1142 = vadd.f32 %v1014, %v1141
    %v1143 = vpop.f32.mrb[0].mxu0
    %1144 = vmatprep.mubr.bf16.mxu0 0
    %1145 = vmatmul.mubr.bf16.gmra.mrb[0].mxu0 %v967
    %v1146 = vpop.f32.mrb[0].mxu0
    %v1147 = vadd.f32 %v1014, %v1146
    %v1148 = vpop.f32.mrb[0].mxu0
    %v1149 = vpop.f32.mrb[0].mxu0
    %v1150 = vadd.f32 %v1014, %v1149
    %v1151 = vpop.f32.mrb[0].mxu0
    %1152 = vmatprep.mubr.bf16.mxu0 0
    %1153 = vmatmul.mubr.bf16.gmra.mrb[0].mxu0 %v968
    %v1154 = vpop.f32.mrb[0].mxu0
    %v1155 = vadd.f32 %v1014, %v1154
    %v1156 = vpop.f32.mrb[0].mxu0
    %v1157 = vpop.f32.mrb[0].mxu0
    %v1158 = vadd.f32 %v1014, %v1157
    %v1159 = vpop.f32.mrb[0].mxu0
    %1160 = vmatprep.mubr.bf16.mxu0 0
    %1161 = vmatmul.mubr.bf16.gmra.mrb[0].mxu0 %v969
    %v1162 = vpop.f32.mrb[0].mxu0
    %v1163 = vadd.f32 %v1014, %v1162
    %v1164 = vpop.f32.mrb[0].mxu0
    %v1165 = vpop.f32.mrb[0].mxu0
    %v1166 = vadd.f32 %v1014, %v1165
    %v1167 = vpop.f32.mrb[0].mxu0
    %1168 = vmatprep.mubr.bf16.mxu0 0
    %1169 = vmatmul.mubr.bf16.gmra.mrb[0].mxu0 %v970
    %v1170 = vpop.f32.mrb[0].mxu0
    %v1171 = vadd.f32 %v1014, %v1170
    %v1172 = vpop.f32.mrb[0].mxu0
    %v1173 = vpop.f32.mrb[0].mxu0
    %v1174 = vadd.f32 %v1014, %v1173
    %v1175 = vpop.f32.mrb[0].mxu0
    %1176 = vmatprep.mubr.bf16.mxu0 0
    %1177 = vmatmul.mubr.bf16.gmra.mrb[0].mxu0 %v971
    %v1178 = vpop.f32.mrb[0].mxu0
    %v1179 = vadd.f32 %v1014, %v1178
    %v1180 = vpop.f32.mrb[0].mxu0
    %v1181 = vpop.f32.mrb[0].mxu0
    %v1182 = vadd.f32 %v1014, %v1181
    %v1183 = vpop.f32.mrb[0].mxu0
    %1184 = vmatprep.mubr.bf16.mxu0 0
    %1185 = vmatmul.mubr.bf16.gmra.mrb[0].mxu0 %v972
    %v1186 = vpop.f32.mrb[0].mxu0
    %v1187 = vadd.f32 %v1014, %v1186
    %v1188 = vpop.f32.mrb[0].mxu0
    %v1189 = vpop.f32.mrb[0].mxu0
    %v1190 = vadd.f32 %v1014, %v1189
    %v1191 = vpop.f32.mrb[0].mxu0
    %1192 = vmatprep.mubr.bf16.mxu0 0
    %1193 = vmatmul.mubr.bf16.gmra.mrb[0].mxu0 %v973
    %v1194 = vpop.f32.mrb[0].mxu0
    %v1195 = vadd.f32 %v1014, %v1194
    %v1196 = vpop.f32.mrb[0].mxu0
    %v1197 = vpop.f32.mrb[0].mxu0
    %v1198 = vadd.f32 %v1014, %v1197
    %v1199 = vpop.f32.mrb[0].mxu0
    %1200 = vmatprep.mubr.bf16.mxu0 0
    %1201 = vmatmul.mubr.bf16.gmra.mrb[0].mxu0 %v974
    %v1202 = vpop.f32.mrb[0].mxu0
    %v1203 = vadd.f32 %v1014, %v1202
    %v1204 = vpop.f32.mrb[0].mxu0
    %v1205 = vpop.f32.mrb[0].mxu0
    %v1206 = vadd.f32 %v1014, %v1205
    %v1207 = vpop.f32.mrb[0].mxu0
    %1208 = vmatprep.mubr.bf16.mxu0 0
    %1209 = vmatmul.mubr.bf16.gmra.mrb[0].mxu0 %v975
    %v1210 = vpop.f32.mrb[0].mxu0
    %v1211 = vadd.f32 %v1014, %v1210
    %v1212 = vpop.f32.mrb[0].mxu0
    %v1213 = vpop.f32.mrb[0].mxu0
    %v1214 = vadd.f32 %v1014, %v1213
    %v1215 = vpop.f32.mrb[0].mxu0
    %1216 = vmatprep.mubr.bf16.mxu0 0
    %1217 = vmatmul.mubr.bf16.gmra.mrb[0].mxu0 %v976
    %v1218 = vpop.f32.mrb[0].mxu0
    %v1219 = vadd.f32 %v1014, %v1218
    %v1220 = vpop.f32.mrb[0].mxu0
    %v1221 = vpop.f32.mrb[0].mxu0
    %v1222 = vadd.f32 %v1014, %v1221
    %v1223 = vpop.f32.mrb[0].mxu0
    %1224 = vmatprep.mubr.bf16.mxu0 0
    %1225 = vmatmul.mubr.bf16.gmra.mrb[0].mxu0 %v977
    %v1226 = vpop.f32.mrb[0].mxu0
    %v1227 = vadd.f32 %v1014, %v1226
    %v1228 = vpop.f32.mrb[0].mxu0
    %v1229 = vpop.f32.mrb[0].mxu0
    %v1230 = vadd.f32 %v1014, %v1229
    %v1231 = vpop.f32.mrb[0].mxu0
    %1232 = vmatprep.mubr.bf16.mxu0 0
    %1233 = vmatmul.mubr.bf16.gmra.mrb[0].mxu0 %v978
    %v1234 = vpop.f32.mrb[0].mxu0
    %v1235 = vadd.f32 %v1014, %v1234
    %v1236 = vpop.f32.mrb[0].mxu0
    %v1237 = vpop.f32.mrb[0].mxu0
    %v1238 = vadd.f32 %v1014, %v1237
    %v1239 = vpop.f32.mrb[0].mxu0
    %1240 = vmatprep.mubr.bf16.mxu0 0
    %1241 = vmatmul.mubr.bf16.gmra.mrb[0].mxu0 %v979
    %v1242 = vpop.f32.mrb[0].mxu0
    %v1243 = vadd.f32 %v1014, %v1242
    %v1244 = vpop.f32.mrb[0].mxu0
    %v1245 = vpop.f32.mrb[0].mxu0
    %v1246 = vadd.f32 %v1014, %v1245
    %v1247 = vpop.f32.mrb[0].mxu0
    %1248 = vmatprep.mubr.bf16.mxu0 0
    %1249 = vmatmul.mubr.bf16.gmra.mrb[0].mxu0 %v980
    %v1250 = vpop.f32.mrb[0].mxu0
    %v1251 = vadd.f32 %v1014, %v1250
    %v1252 = vpop.f32.mrb[0].mxu0
    %v1253 = vpop.f32.mrb[0].mxu0
    %v1254 = vadd.f32 %v1014, %v1253
    %v1255 = vpop.f32.mrb[0].mxu0
    %1256 = vmatprep.mubr.bf16.mxu0 0
    %1257 = vmatmul.mubr.bf16.gmra.mrb[0].mxu0 %v981
    %v1258 = vpop.f32.mrb[0].mxu0
    %v1259 = vadd.f32 %v1014, %v1258
    %v1260 = vpop.f32.mrb[0].mxu0
    %v1261 = vpop.f32.mrb[0].mxu0
    %v1262 = vadd.f32 %v1014, %v1261
    %v1263 = vpop.f32.mrb[0].mxu0
    %1264 = vmatprep.mubr.bf16.mxu0 0
    %1265 = vmatmul.mubr.bf16.gmra.mrb[0].mxu0 %v982
    %v1266 = vpop.f32.mrb[0].mxu0
    %v1267 = vadd.f32 %v1014, %v1266
    %v1268 = vpop.f32.mrb[0].mxu0
    %v1269 = vpop.f32.mrb[0].mxu0
    %v1270 = vadd.f32 %v1014, %v1269
    %v1271 = vpop.f32.mrb[0].mxu0
    %1272 = vmatprep.mubr.bf16.mxu0 0
    %1273 = vmatmul.mubr.bf16.gmra.mrb[0].mxu0 %v983
    %v1274 = vpop.f32.mrb[0].mxu0
    %v1275 = vadd.f32 %v1014, %v1274
    %v1276 = vpop.f32.mrb[0].mxu0
    %v1277 = vpop.f32.mrb[0].mxu0
    %v1278 = vadd.f32 %v1014, %v1277
    %v1279 = vpop.f32.mrb[0].mxu0
    %1280 = vmatprep.mubr.bf16.mxu0 0
    %1281 = vmatmul.mubr.bf16.gmra.mrb[0].mxu0 %v984
    %v1282 = vpop.f32.mrb[0].mxu0
    %v1283 = vadd.f32 %v1014, %v1282
    %v1284 = vpop.f32.mrb[0].mxu0
    %v1285 = vpop.f32.mrb[0].mxu0
    %v1286 = vadd.f32 %v1014, %v1285
    %v1287 = vpop.f32.mrb[0].mxu0
    %1288 = vmatprep.mubr.bf16.mxu0 0
    %1289 = vmatmul.mubr.bf16.gmra.mrb[0].mxu0 %v985
    %v1290 = vpop.f32.mrb[0].mxu0
    %v1291 = vadd.f32 %v1014, %v1290
    %v1292 = vpop.f32.mrb[0].mxu0
    %v1293 = vpop.f32.mrb[0].mxu0
    %v1294 = vadd.f32 %v1014, %v1293
    %v1295 = vpop.f32.mrb[0].mxu0
    %1296 = vmatprep.mubr.bf16.mxu0 0
    %1297 = vmatmul.mubr.bf16.gmra.mrb[0].mxu0 %v986
    %v1298 = vpop.f32.mrb[0].mxu0
    %v1299 = vadd.f32 %v1014, %v1298
    %v1300 = vpop.f32.mrb[0].mxu0
    %v1301 = vpop.f32.mrb[0].mxu0
    %v1302 = vadd.f32 %v1014, %v1301
    %v1303 = vpop.f32.mrb[0].mxu0
    %1304 = vmatprep.mubr.bf16.mxu0 0
    %1305 = vmatmul.mubr.bf16.gmra.mrb[0].mxu0 %v987
    %v1306 = vpop.f32.mrb[0].mxu0
    %v1307 = vadd.f32 %v1014, %v1306
    %v1308 = vpop.f32.mrb[0].mxu0
    %v1309 = vpop.f32.mrb[0].mxu0
    %v1310 = vadd.f32 %v1014, %v1309
    %v1311 = vpop.f32.mrb[0].mxu0
    %1312 = vmatprep.mubr.bf16.mxu0 0
    %1313 = vmatmul.mubr.bf16.gmra.mrb[0].mxu0 %v988
    %v1314 = vpop.f32.mrb[0].mxu0
    %v1315 = vadd.f32 %v1014, %v1314
    %v1316 = vpop.f32.mrb[0].mxu0
    %v1317 = vpop.f32.mrb[0].mxu0
    %v1318 = vadd.f32 %v1014, %v1317
    %v1319 = vpop.f32.mrb[0].mxu0
    %1320 = vmatprep.mubr.bf16.mxu0 0
    %1321 = vmatmul.mubr.bf16.gmra.mrb[0].mxu0 %v989
    %v1322 = vpop.f32.mrb[0].mxu0
    %v1323 = vadd.f32 %v1014, %v1322
    %v1324 = vpop.f32.mrb[0].mxu0
    %v1325 = vpop.f32.mrb[0].mxu0
    %v1326 = vadd.f32 %v1014, %v1325
    %v1327 = vpop.f32.mrb[0].mxu0
    %1328 = vmatprep.mubr.bf16.mxu0 0
    %1329 = vmatmul.mubr.bf16.gmra.mrb[0].mxu0 %v990
    %v1330 = vpop.f32.mrb[0].mxu0
    %v1331 = vadd.f32 %v1014, %v1330
    %v1332 = vpop.f32.mrb[0].mxu0
    %v1333 = vpop.f32.mrb[0].mxu0
    %v1334 = vadd.f32 %v1014, %v1333
    %v1335 = vpop.f32.mrb[0].mxu0
    %1336 = vmatprep.mubr.bf16.mxu0 0
    %1337 = vmatmul.mubr.bf16.gmra.mrb[0].mxu0 %v991
    %v1338 = vpop.f32.mrb[0].mxu0
    %v1339 = vadd.f32 %v1014, %v1338
    %v1340 = vpop.f32.mrb[0].mxu0
    %v1341 = vpop.f32.mrb[0].mxu0
    %v1342 = vadd.f32 %v1014, %v1341
    %v1343 = vpop.f32.mrb[0].mxu0
    %1344 = vmatprep.mubr.bf16.mxu0 0
    %1345 = vmatmul.mubr.bf16.gmra.mrb[0].mxu0 %v992
    %v1346 = vpop.f32.mrb[0].mxu0
    %v1347 = vadd.f32 %v1014, %v1346
    %v1348 = vpop.f32.mrb[0].mxu0
    %v1349 = vpop.f32.mrb[0].mxu0
    %v1350 = vadd.f32 %v1014, %v1349
    %v1351 = vpop.f32.mrb[0].mxu0
    %1352 = vdwg.mxu0
    %1353 = vst [vmem:[#allocation7] sm:$0xff] %v1099
    %1354 = vst [vmem:[#allocation7 + $0x8] sm:$0xff] %v1102
    %1355 = vst [vmem:[#allocation7 + $0x10] sm:$0xff] %v1107
    %1356 = vst [vmem:[#allocation7 + $0x18] sm:$0xff] %v1110
    %1357 = vst [vmem:[#allocation7 + $0x20] sm:$0xff] %v1115
    %1358 = vst [vmem:[#allocation7 + $0x28] sm:$0xff] %v1118
    %1359 = vst [vmem:[#allocation7 + $0x30] sm:$0xff] %v1123
    %1360 = vst [vmem:[#allocation7 + $0x38] sm:$0xff] %v1126
    %1361 = vst [vmem:[#allocation7 + $0x40] sm:$0xff] %v1131
    %1362 = vst [vmem:[#allocation7 + $0x48] sm:$0xff] %v1134
    %1363 = vst [vmem:[#allocation7 + $0x50] sm:$0xff] %v1139
    %1364 = vst [vmem:[#allocation7 + $0x58] sm:$0xff] %v1142
    %1365 = vst [vmem:[#allocation7 + $0x60] sm:$0xff] %v1147
    %1366 = vst [vmem:[#allocation7 + $0x68] sm:$0xff] %v1150
    %1367 = vst [vmem:[#allocation7 + $0x70] sm:$0xff] %v1155
    %1368 = vst [vmem:[#allocation7 + $0x78] sm:$0xff] %v1158
    %1369 = vst [vmem:[#allocation7 + $0x80] sm:$0xff] %v1163
    %1370 = vst [vmem:[#allocation7 + $0x88] sm:$0xff] %v1166
    %1371 = vst [vmem:[#allocation7 + $0x90] sm:$0xff] %v1171
    %1372 = vst [vmem:[#allocation7 + $0x98] sm:$0xff] %v1174
    %1373 = vst [vmem:[#allocation7 + $0xa0] sm:$0xff] %v1179
    %1374 = vst [vmem:[#allocation7 + $0xa8] sm:$0xff] %v1182
    %1375 = vst [vmem:[#allocation7 + $0xb0] sm:$0xff] %v1187
    %1376 = vst [vmem:[#allocation7 + $0xb8] sm:$0xff] %v1190
    %1377 = vst [vmem:[#allocation7 + $0xc0] sm:$0xff] %v1195
    %1378 = vst [vmem:[#allocation7 + $0xc8] sm:$0xff] %v1198
    %1379 = vst [vmem:[#allocation7 + $0xd0] sm:$0xff] %v1203
    %1380 = vst [vmem:[#allocation7 + $0xd8] sm:$0xff] %v1206
    %1381 = vst [vmem:[#allocation7 + $0xe0] sm:$0xff] %v1211
    %1382 = vst [vmem:[#allocation7 + $0xe8] sm:$0xff] %v1214
    %1383 = vst [vmem:[#allocation7 + $0xf0] sm:$0xff] %v1219
    %1384 = vst [vmem:[#allocation7 + $0xf8] sm:$0xff] %v1222
    %1385 = vst [vmem:[#allocation7 + $0x100] sm:$0xff] %v1227
    %1386 = vst [vmem:[#allocation7 + $0x108] sm:$0xff] %v1230
    %1387 = vst [vmem:[#allocation7 + $0x110] sm:$0xff] %v1235
    %1388 = vst [vmem:[#allocation7 + $0x118] sm:$0xff] %v1238
    %1389 = vst [vmem:[#allocation7 + $0x120] sm:$0xff] %v1243
    %1390 = vst [vmem:[#allocation7 + $0x128] sm:$0xff] %v1246
    %1391 = vst [vmem:[#allocation7 + $0x130] sm:$0xff] %v1251
    %1392 = vst [vmem:[#allocation7 + $0x138] sm:$0xff] %v1254
    %1393 = vst [vmem:[#allocation7 + $0x140] sm:$0xff] %v1259
    %1394 = vst [vmem:[#allocation7 + $0x148] sm:$0xff] %v1262
    %1395 = vst [vmem:[#allocation7 + $0x150] sm:$0xff] %v1267
    %1396 = vst [vmem:[#allocation7 + $0x158] sm:$0xff] %v1270
    %1397 = vst [vmem:[#allocation7 + $0x160] sm:$0xff] %v1275
    %1398 = vst [vmem:[#allocation7 + $0x168] sm:$0xff] %v1278
    %1399 = vst [vmem:[#allocation7 + $0x170] sm:$0xff] %v1283
    %1400 = vst [vmem:[#allocation7 + $0x178] sm:$0xff] %v1286
    %1401 = vst [vmem:[#allocation7 + $0x180] sm:$0xff] %v1291
    %1402 = vst [vmem:[#allocation7 + $0x188] sm:$0xff] %v1294
    %1403 = vst [vmem:[#allocation7 + $0x190] sm:$0xff] %v1299
    %1404 = vst [vmem:[#allocation7 + $0x198] sm:$0xff] %v1302
    %1405 = vst [vmem:[#allocation7 + $0x1a0] sm:$0xff] %v1307
    %1406 = vst [vmem:[#allocation7 + $0x1a8] sm:$0xff] %v1310
    %1407 = vst [vmem:[#allocation7 + $0x1b0] sm:$0xff] %v1315
    %1408 = vst [vmem:[#allocation7 + $0x1b8] sm:$0xff] %v1318
    %1409 = vst [vmem:[#allocation7 + $0x1c0] sm:$0xff] %v1323
    %1410 = vst [vmem:[#allocation7 + $0x1c8] sm:$0xff] %v1326
    %1411 = vst [vmem:[#allocation7 + $0x1d0] sm:$0xff] %v1331
    %1412 = vst [vmem:[#allocation7 + $0x1d8] sm:$0xff] %v1334
    %1413 = vst [vmem:[#allocation7 + $0x1e0] sm:$0xff] %v1339
    %1414 = vst [vmem:[#allocation7 + $0x1e8] sm:$0xff] %v1342
    %1415 = vst [vmem:[#allocation7 + $0x1f0] sm:$0xff] %v1347
    %1416 = vst [vmem:[#allocation7 + $0x1f8] sm:$0xff] %v1350
    // Predicated region
    $region30: #{tpu_custom_call.1} parent=1 // pred_check
      _
    $region31: #{tpu_custom_call.1} parent=1 // pred_check_branch
      %1418 = sbr.rel (0) target = $region33
    $region32: #{tpu_custom_call.1} parent=1 // pred_region
      %s1420 = ssub.s32 8192, 8192
      %1421 = vsyncadd [#allocation4], %s1420
      %s1422 = sshll.u32 [#allocation7], 4
      %s1423 = int_to_ptr.vmem [resolvable:$true] %s1422
      %1428 = dma.vmem_to_hbm [thread:$0]  %s1423, 8192, %s5, [#allocation4], 128, 128, 8
    $region33: #{tpu_custom_call.1} parent=1 // pred_fallthru
      _
    // Predicated region
    $region34: #{tpu_custom_call.1} parent=1 // pred_check
      _
    $region35: #{tpu_custom_call.1} parent=1 // pred_check_branch
      %1430 = sbr.rel (0) target = $region37
    $region36: #{tpu_custom_call.1} parent=1 // pred_region
      %1431 = dma.done [#allocation4], 8192
    $region37: #{tpu_custom_call.1} parent=1 // pred_fallthru
      _
    %1432 = vsyncpa [#allocation3], 1
    %1433 = vsyncpa [#allocation6], 1
    %1434 = vsyncpa [#allocation4], 1

// kernel: tpu_custom_call.1
$region0: #{tpu_custom_call.1}
  #allocation0 [shape = 'u32[]', space=smem, size = 0x4, offset = 0x4, fixed_abs, tag = 'smem constant byte address 0x4 - core index']
  #allocation1 [shape = 'u32[144,128]{1,0:T(1,128)}', space=vmem, size = 0x12000, scoped, tag = 'internal scratch']
  %s0 = inlined_call_operand.hbm [shape: f32[512,128], index: 0, kind: input, shape index: {}]
  %s1 = inlined_call_operand.vmem [shape: f32[1,128], index: 1, kind: input, shape index: {}]
  %s2 = inlined_call_operand.vmem [shape: f32[1,128], index: 2, kind: input, shape index: {}]
  %s3 = inlined_call_operand.hbm [shape: bf16[128,128], index: 3, kind: input, shape index: {}]
  %s4 = inlined_call_operand.vmem [shape: f32[1,128], index: 4, kind: input, shape index: {}]
  %s5 = inlined_call_operand.hbm [shape: f32[512,128], index: 5, kind: output, shape index: {}]
  %s6 = sld [smem:[#allocation0]]
  $region38: #{tpu_custom_call.1} parent=0
    _
  %s8 = ssub.s32 1, %s6
  %s9 = scalar_select 0, %s8, %s6
  $region1: #{tpu_custom_call.1} parent=0
    #allocation2 [shape = 'u8[262144]{0}', space=vmem, size = 0x40000, scoped, tag = 'input window, operand 0, single buffered']
    #allocation3 [shape = 's32[1]{0}', space=sflag, size = 0x4, scoped, tag = 'scoped memory for tpu_custom_call.1']
    #allocation4 [shape = 's32[1]{0}', space=sflag, size = 0x4, scoped, tag = 'scoped memory for tpu_custom_call.1']
    #allocation5 [shape = 'u8[32768]{0}', space=vmem, size = 0x8000, scoped, tag = 'input window, operand 3, single buffered']
    #allocation6 [shape = 's32[1]{0}', space=sflag, size = 0x4, scoped, tag = 'scoped memory for tpu_custom_call.1']
    #allocation7 [shape = 'u8[262144]{0}', space=vmem, size = 0x40000, scoped, tag = 'output window, operand 0, single buffered']
    %10 = vsyncpa [#allocation3], 0
    %11 = vsyncpa [#allocation6], 0
    %12 = vsyncpa [#allocation4], 0
    // Predicated region
    $region2: #{tpu_custom_call.1} parent=1 // pred_check
      _
    $region3: #{tpu_custom_call.1} parent=1 // pred_check_branch
      %14 = sbr.rel (0) target = $region5
    $region4: #{tpu_custom_call.1} parent=1 // pred_region
      %s16 = ssub.s32 8192, 8192
      %17 = vsyncadd [#allocation3], %s16
      %s18 = sshll.u32 [#allocation2], 4
      %s19 = int_to_ptr.vmem [resolvable:$true] %s18
      %24 = dma.hbm_to_vmem [thread:$0]  %s0, 8192, %s19, [#allocation3], 128, 128, 8
    $region5: #{tpu_custom_call.1} parent=1 // pred_fallthru
      _
    // Predicated region
    $region6: #{tpu_custom_call.1} parent=1 // pred_check
      _
    $region7: #{tpu_custom_call.1} parent=1 // pred_check_branch
      %26 = sbr.rel (0) target = $region9
    $region8: #{tpu_custom_call.1} parent=1 // pred_region
      _
    $region9: #{tpu_custom_call.1} parent=1 // pred_fallthru
      _
    // Predicated region
    $region10: #{tpu_custom_call.1} parent=1 // pred_check
      _
    $region11: #{tpu_custom_call.1} parent=1 // pred_check_branch
      %28 = sbr.rel (0) target = $region13
    $region12: #{tpu_custom_call.1} parent=1 // pred_region
      _
    $region13: #{tpu_custom_call.1} parent=1 // pred_fallthru
      _
    // Predicated region
    $region14: #{tpu_custom_call.1} parent=1 // pred_check
      _
    $region15: #{tpu_custom_call.1} parent=1 // pred_check_branch
      %30 = sbr.rel (0) target = $region17
    $region16: #{tpu_custom_call.1} parent=1 // pred_region
      %s32 = ssub.s32 1024, 1024
      %33 = vsyncadd [#allocation6], %s32
      %s34 = sshll.u32 [#allocation5], 4
      %s35 = int_to_ptr.vmem [resolvable:$true] %s34
      %40 = dma.hbm_to_vmem [thread:$0]  %s3, 1024, %s35, [#allocation6], 64, 64, 4
    $region17: #{tpu_custom_call.1} parent=1 // pred_fallthru
      _
    // Predicated region
    $region18: #{tpu_custom_call.1} parent=1 // pred_check
      _
    $region19: #{tpu_custom_call.1} parent=1 // pred_check_branch
      %42 = sbr.rel (0) target = $region21
    $region20: #{tpu_custom_call.1} parent=1 // pred_region
      _
    $region21: #{tpu_custom_call.1} parent=1 // pred_fallthru
      _
    // Predicated region
    $region22: #{tpu_custom_call.1} parent=1 // pred_check
      _
    $region23: #{tpu_custom_call.1} parent=1 // pred_check_branch
      %44 = sbr.rel (0) target = $region25
    $region24: #{tpu_custom_call.1} parent=1 // pred_region
      %45 = dma.done [#allocation3], 8192
    $region25: #{tpu_custom_call.1} parent=1 // pred_fallthru
      _
    // Predicated region
    $region26: #{tpu_custom_call.1} parent=1 // pred_check
      _
    $region27: #{tpu_custom_call.1} parent=1 // pred_check_branch
      %47 = sbr.rel (0) target = $region29
    $region28: #{tpu_custom_call.1} parent=1 // pred_region
      %48 = dma.done [#allocation6], 1024
    $region29: #{tpu_custom_call.1} parent=1 // pred_fallthru
      _
    %v50 = vld [vmem:[#allocation2] sm:$0xff]
    %v51 = vld [vmem:[#allocation2 + $0x8] sm:$0xff]
    %v52 = vld [vmem:[#allocation2 + $0x10] sm:$0xff]
    %v53 = vld [vmem:[#allocation2 + $0x18] sm:$0xff]
    %v54 = vld [vmem:[#allocation2 + $0x20] sm:$0xff]
    %v55 = vld [vmem:[#allocation2 + $0x28] sm:$0xff]
    %v56 = vld [vmem:[#allocation2 + $0x30] sm:$0xff]
    %v57 = vld [vmem:[#allocation2 + $0x38] sm:$0xff]
    %v58 = vld [vmem:[#allocation2 + $0x40] sm:$0xff]
    %v59 = vld [vmem:[#allocation2 + $0x48] sm:$0xff]
    %v60 = vld [vmem:[#allocation2 + $0x50] sm:$0xff]
    %v61 = vld [vmem:[#allocation2 + $0x58] sm:$0xff]
    %v62 = vld [vmem:[#allocation2 + $0x60] sm:$0xff]
    %v63 = vld [vmem:[#allocation2 + $0x68] sm:$0xff]
    %v64 = vld [vmem:[#allocation2 + $0x70] sm:$0xff]
    %v65 = vld [vmem:[#allocation2 + $0x78] sm:$0xff]
    %v66 = vld [vmem:[#allocation2 + $0x80] sm:$0xff]
    %v67 = vld [vmem:[#allocation2 + $0x88] sm:$0xff]
    %v68 = vld [vmem:[#allocation2 + $0x90] sm:$0xff]
    %v69 = vld [vmem:[#allocation2 + $0x98] sm:$0xff]
    %v70 = vld [vmem:[#allocation2 + $0xa0] sm:$0xff]
    %v71 = vld [vmem:[#allocation2 + $0xa8] sm:$0xff]
    %v72 = vld [vmem:[#allocation2 + $0xb0] sm:$0xff]
    %v73 = vld [vmem:[#allocation2 + $0xb8] sm:$0xff]
    %v74 = vld [vmem:[#allocation2 + $0xc0] sm:$0xff]
    %v75 = vld [vmem:[#allocation2 + $0xc8] sm:$0xff]
    %v76 = vld [vmem:[#allocation2 + $0xd0] sm:$0xff]
    %v77 = vld [vmem:[#allocation2 + $0xd8] sm:$0xff]
    %v78 = vld [vmem:[#allocation2 + $0xe0] sm:$0xff]
    %v79 = vld [vmem:[#allocation2 + $0xe8] sm:$0xff]
    %v80 = vld [vmem:[#allocation2 + $0xf0] sm:$0xff]
    %v81 = vld [vmem:[#allocation2 + $0xf8] sm:$0xff]
    %v82 = vld [vmem:[#allocation2 + $0x100] sm:$0xff]
    %v83 = vld [vmem:[#allocation2 + $0x108] sm:$0xff]
    %v84 = vld [vmem:[#allocation2 + $0x110] sm:$0xff]
    %v85 = vld [vmem:[#allocation2 + $0x118] sm:$0xff]
    %v86 = vld [vmem:[#allocation2 + $0x120] sm:$0xff]
    %v87 = vld [vmem:[#allocation2 + $0x128] sm:$0xff]
    %v88 = vld [vmem:[#allocation2 + $0x130] sm:$0xff]
    %v89 = vld [vmem:[#allocation2 + $0x138] sm:$0xff]
    %v90 = vld [vmem:[#allocation2 + $0x140] sm:$0xff]
    %v91 = vld [vmem:[#allocation2 + $0x148] sm:$0xff]
    %v92 = vld [vmem:[#allocation2 + $0x150] sm:$0xff]
    %v93 = vld [vmem:[#allocation2 + $0x158] sm:$0xff]
    %v94 = vld [vmem:[#allocation2 + $0x160] sm:$0xff]
    %v95 = vld [vmem:[#allocation2 + $0x168] sm:$0xff]
    %v96 = vld [vmem:[#allocation2 + $0x170] sm:$0xff]
    %v97 = vld [vmem:[#allocation2 + $0x178] sm:$0xff]
    %v98 = vld [vmem:[#allocation2 + $0x180] sm:$0xff]
    %v99 = vld [vmem:[#allocation2 + $0x188] sm:$0xff]
    %v100 = vld [vmem:[#allocation2 + $0x190] sm:$0xff]
    %v101 = vld [vmem:[#allocation2 + $0x198] sm:$0xff]
    %v102 = vld [vmem:[#allocation2 + $0x1a0] sm:$0xff]
    %v103 = vld [vmem:[#allocation2 + $0x1a8] sm:$0xff]
    %v104 = vld [vmem:[#allocation2 + $0x1b0] sm:$0xff]
    %v105 = vld [vmem:[#allocation2 + $0x1b8] sm:$0xff]
    %v106 = vld [vmem:[#allocation2 + $0x1c0] sm:$0xff]
    %v107 = vld [vmem:[#allocation2 + $0x1c8] sm:$0xff]
    %v108 = vld [vmem:[#allocation2 + $0x1d0] sm:$0xff]
    %v109 = vld [vmem:[#allocation2 + $0x1d8] sm:$0xff]
    %v110 = vld [vmem:[#allocation2 + $0x1e0] sm:$0xff]
    %v111 = vld [vmem:[#allocation2 + $0x1e8] sm:$0xff]
    %v112 = vld [vmem:[#allocation2 + $0x1f0] sm:$0xff]
    %v113 = vld [vmem:[#allocation2 + $0x1f8] sm:$0xff]
    %114 = vadd.xlane.f32.xlu0 %v50
    %v115 = vpop.xlane.xlu0 %114
    %116 = vadd.xlane.f32.xlu0 %v51
    %v117 = vpop.xlane.xlu0 %116
    %118 = vadd.xlane.f32.xlu0 %v52
    %v119 = vpop.xlane.xlu0 %118
    %120 = vadd.xlane.f32.xlu0 %v53
    %v121 = vpop.xlane.xlu0 %120
    %122 = vadd.xlane.f32.xlu0 %v54
    %v123 = vpop.xlane.xlu0 %122
    %124 = vadd.xlane.f32.xlu0 %v55
    %v125 = vpop.xlane.xlu0 %124
    %126 = vadd.xlane.f32.xlu0 %v56
    %v127 = vpop.xlane.xlu0 %126
    %128 = vadd.xlane.f32.xlu0 %v57
    %v129 = vpop.xlane.xlu0 %128
    %130 = vadd.xlane.f32.xlu0 %v58
    %v131 = vpop.xlane.xlu0 %130
    %132 = vadd.xlane.f32.xlu0 %v59
    %v133 = vpop.xlane.xlu0 %132
    %134 = vadd.xlane.f32.xlu0 %v60
    %v135 = vpop.xlane.xlu0 %134
    %136 = vadd.xlane.f32.xlu0 %v61
    %v137 = vpop.xlane.xlu0 %136
    %138 = vadd.xlane.f32.xlu0 %v62
    %v139 = vpop.xlane.xlu0 %138
    %140 = vadd.xlane.f32.xlu0 %v63
    %v141 = vpop.xlane.xlu0 %140
    %142 = vadd.xlane.f32.xlu0 %v64
    %v143 = vpop.xlane.xlu0 %142
    %144 = vadd.xlane.f32.xlu0 %v65
    %v145 = vpop.xlane.xlu0 %144
    %146 = vadd.xlane.f32.xlu0 %v66
    %v147 = vpop.xlane.xlu0 %146
    %148 = vadd.xlane.f32.xlu0 %v67
    %v149 = vpop.xlane.xlu0 %148
    %150 = vadd.xlane.f32.xlu0 %v68
    %v151 = vpop.xlane.xlu0 %150
    %152 = vadd.xlane.f32.xlu0 %v69
    %v153 = vpop.xlane.xlu0 %152
    %154 = vadd.xlane.f32.xlu0 %v70
    %v155 = vpop.xlane.xlu0 %154
    %156 = vadd.xlane.f32.xlu0 %v71
    %v157 = vpop.xlane.xlu0 %156
    %158 = vadd.xlane.f32.xlu0 %v72
    %v159 = vpop.xlane.xlu0 %158
    %160 = vadd.xlane.f32.xlu0 %v73
    %v161 = vpop.xlane.xlu0 %160
    %162 = vadd.xlane.f32.xlu0 %v74
    %v163 = vpop.xlane.xlu0 %162
    %164 = vadd.xlane.f32.xlu0 %v75
    %v165 = vpop.xlane.xlu0 %164
    %166 = vadd.xlane.f32.xlu0 %v76
    %v167 = vpop.xlane.xlu0 %166
    %168 = vadd.xlane.f32.xlu0 %v77
    %v169 = vpop.xlane.xlu0 %168
    %170 = vadd.xlane.f32.xlu0 %v78
    %v171 = vpop.xlane.xlu0 %170
    %172 = vadd.xlane.f32.xlu0 %v79
    %v173 = vpop.xlane.xlu0 %172
    %174 = vadd.xlane.f32.xlu0 %v80
    %v175 = vpop.xlane.xlu0 %174
    %176 = vadd.xlane.f32.xlu0 %v81
    %v177 = vpop.xlane.xlu0 %176
    %178 = vadd.xlane.f32.xlu0 %v82
    %v179 = vpop.xlane.xlu0 %178
    %180 = vadd.xlane.f32.xlu0 %v83
    %v181 = vpop.xlane.xlu0 %180
    %182 = vadd.xlane.f32.xlu0 %v84
    %v183 = vpop.xlane.xlu0 %182
    %184 = vadd.xlane.f32.xlu0 %v85
    %v185 = vpop.xlane.xlu0 %184
    %186 = vadd.xlane.f32.xlu0 %v86
    %v187 = vpop.xlane.xlu0 %186
    %188 = vadd.xlane.f32.xlu0 %v87
    %v189 = vpop.xlane.xlu0 %188
    %190 = vadd.xlane.f32.xlu0 %v88
    %v191 = vpop.xlane.xlu0 %190
    %192 = vadd.xlane.f32.xlu0 %v89
    %v193 = vpop.xlane.xlu0 %192
    %194 = vadd.xlane.f32.xlu0 %v90
    %v195 = vpop.xlane.xlu0 %194
    %196 = vadd.xlane.f32.xlu0 %v91
    %v197 = vpop.xlane.xlu0 %196
    %198 = vadd.xlane.f32.xlu0 %v92
    %v199 = vpop.xlane.xlu0 %198
    %200 = vadd.xlane.f32.xlu0 %v93
    %v201 = vpop.xlane.xlu0 %200
    %202 = vadd.xlane.f32.xlu0 %v94
    %v203 = vpop.xlane.xlu0 %202
    %204 = vadd.xlane.f32.xlu0 %v95
    %v205 = vpop.xlane.xlu0 %204
    %206 = vadd.xlane.f32.xlu0 %v96
    %v207 = vpop.xlane.xlu0 %206
    %208 = vadd.xlane.f32.xlu0 %v97
    %v209 = vpop.xlane.xlu0 %208
    %210 = vadd.xlane.f32.xlu0 %v98
    %v211 = vpop.xlane.xlu0 %210
    %212 = vadd.xlane.f32.xlu0 %v99
    %v213 = vpop.xlane.xlu0 %212
    %214 = vadd.xlane.f32.xlu0 %v100
    %v215 = vpop.xlane.xlu0 %214
    %216 = vadd.xlane.f32.xlu0 %v101
    %v217 = vpop.xlane.xlu0 %216
    %218 = vadd.xlane.f32.xlu0 %v102
    %v219 = vpop.xlane.xlu0 %218
    %220 = vadd.xlane.f32.xlu0 %v103
    %v221 = vpop.xlane.xlu0 %220
    %222 = vadd.xlane.f32.xlu0 %v104
    %v223 = vpop.xlane.xlu0 %222
    %224 = vadd.xlane.f32.xlu0 %v105
    %v225 = vpop.xlane.xlu0 %224
    %226 = vadd.xlane.f32.xlu0 %v106
    %v227 = vpop.xlane.xlu0 %226
    %228 = vadd.xlane.f32.xlu0 %v107
    %v229 = vpop.xlane.xlu0 %228
    %230 = vadd.xlane.f32.xlu0 %v108
    %v231 = vpop.xlane.xlu0 %230
    %232 = vadd.xlane.f32.xlu0 %v109
    %v233 = vpop.xlane.xlu0 %232
    %234 = vadd.xlane.f32.xlu0 %v110
    %v235 = vpop.xlane.xlu0 %234
    %236 = vadd.xlane.f32.xlu0 %v111
    %v237 = vpop.xlane.xlu0 %236
    %238 = vadd.xlane.f32.xlu0 %v112
    %v239 = vpop.xlane.xlu0 %238
    %240 = vadd.xlane.f32.xlu0 %v113
    %v241 = vpop.xlane.xlu0 %240
    %v242 = vrcp.pop 128.0
    %v243 = vmul.f32 %v115, %v242
    %v244 = vmul.f32 %v117, %v242
    %v245 = vmul.f32 %v119, %v242
    %v246 = vmul.f32 %v121, %v242
    %v247 = vmul.f32 %v123, %v242
    %v248 = vmul.f32 %v125, %v242
    %v249 = vmul.f32 %v127, %v242
    %v250 = vmul.f32 %v129, %v242
    %v251 = vmul.f32 %v131, %v242
    %v252 = vmul.f32 %v133, %v242
    %v253 = vmul.f32 %v135, %v242
    %v254 = vmul.f32 %v137, %v242
    %v255 = vmul.f32 %v139, %v242
    %v256 = vmul.f32 %v141, %v242
    %v257 = vmul.f32 %v143, %v242
    %v258 = vmul.f32 %v145, %v242
    %v259 = vmul.f32 %v147, %v242
    %v260 = vmul.f32 %v149, %v242
    %v261 = vmul.f32 %v151, %v242
    %v262 = vmul.f32 %v153, %v242
    %v263 = vmul.f32 %v155, %v242
    %v264 = vmul.f32 %v157, %v242
    %v265 = vmul.f32 %v159, %v242
    %v266 = vmul.f32 %v161, %v242
    %v267 = vmul.f32 %v163, %v242
    %v268 = vmul.f32 %v165, %v242
    %v269 = vmul.f32 %v167, %v242
    %v270 = vmul.f32 %v169, %v242
    %v271 = vmul.f32 %v171, %v242
    %v272 = vmul.f32 %v173, %v242
    %v273 = vmul.f32 %v175, %v242
    %v274 = vmul.f32 %v177, %v242
    %v275 = vmul.f32 %v179, %v242
    %v276 = vmul.f32 %v181, %v242
    %v277 = vmul.f32 %v183, %v242
    %v278 = vmul.f32 %v185, %v242
    %v279 = vmul.f32 %v187, %v242
    %v280 = vmul.f32 %v189, %v242
    %v281 = vmul.f32 %v191, %v242
    %v282 = vmul.f32 %v193, %v242
    %v283 = vmul.f32 %v195, %v242
    %v284 = vmul.f32 %v197, %v242
    %v285 = vmul.f32 %v199, %v242
    %v286 = vmul.f32 %v201, %v242
    %v287 = vmul.f32 %v203, %v242
    %v288 = vmul.f32 %v205, %v242
    %v289 = vmul.f32 %v207, %v242
    %v290 = vmul.f32 %v209, %v242
    %v291 = vmul.f32 %v211, %v242
    %v292 = vmul.f32 %v213, %v242
    %v293 = vmul.f32 %v215, %v242
    %v294 = vmul.f32 %v217, %v242
    %v295 = vmul.f32 %v219, %v242
    %v296 = vmul.f32 %v221, %v242
    %v297 = vmul.f32 %v223, %v242
    %v298 = vmul.f32 %v225, %v242
    %v299 = vmul.f32 %v227, %v242
    %v300 = vmul.f32 %v229, %v242
    %v301 = vmul.f32 %v231, %v242
    %v302 = vmul.f32 %v233, %v242
    %v303 = vmul.f32 %v235, %v242
    %v304 = vmul.f32 %v237, %v242
    %v305 = vmul.f32 %v239, %v242
    %v306 = vmul.f32 %v241, %v242
    %v307 = vsub.f32 %v50, %v243
    %v308 = vsub.f32 %v51, %v244
    %v309 = vsub.f32 %v52, %v245
    %v310 = vsub.f32 %v53, %v246
    %v311 = vsub.f32 %v54, %v247
    %v312 = vsub.f32 %v55, %v248
    %v313 = vsub.f32 %v56, %v249
    %v314 = vsub.f32 %v57, %v250
    %v315 = vsub.f32 %v58, %v251
    %v316 = vsub.f32 %v59, %v252
    %v317 = vsub.f32 %v60, %v253
    %v318 = vsub.f32 %v61, %v254
    %v319 = vsub.f32 %v62, %v255
    %v320 = vsub.f32 %v63, %v256
    %v321 = vsub.f32 %v64, %v257
    %v322 = vsub.f32 %v65, %v258
    %v323 = vsub.f32 %v66, %v259
    %v324 = vsub.f32 %v67, %v260
    %v325 = vsub.f32 %v68, %v261
    %v326 = vsub.f32 %v69, %v262
    %v327 = vsub.f32 %v70, %v263
    %v328 = vsub.f32 %v71, %v264
    %v329 = vsub.f32 %v72, %v265
    %v330 = vsub.f32 %v73, %v266
    %v331 = vsub.f32 %v74, %v267
    %v332 = vsub.f32 %v75, %v268
    %v333 = vsub.f32 %v76, %v269
    %v334 = vsub.f32 %v77, %v270
    %v335 = vsub.f32 %v78, %v271
    %v336 = vsub.f32 %v79, %v272
    %v337 = vsub.f32 %v80, %v273
    %v338 = vsub.f32 %v81, %v274
    %v339 = vsub.f32 %v82, %v275
    %v340 = vsub.f32 %v83, %v276
    %v341 = vsub.f32 %v84, %v277
    %v342 = vsub.f32 %v85, %v278
    %v343 = vsub.f32 %v86, %v279
    %v344 = vsub.f32 %v87, %v280
    %v345 = vsub.f32 %v88, %v281
    %v346 = vsub.f32 %v89, %v282
    %v347 = vsub.f32 %v90, %v283
    %v348 = vsub.f32 %v91, %v284
    %v349 = vsub.f32 %v92, %v285
    %v350 = vsub.f32 %v93, %v286
    %v351 = vsub.f32 %v94, %v287
    %v352 = vsub.f32 %v95, %v288
    %v353 = vsub.f32 %v96, %v289
    %v354 = vsub.f32 %v97, %v290
    %v355 = vsub.f32 %v98, %v291
    %v356 = vsub.f32 %v99, %v292
    %v357 = vsub.f32 %v100, %v293
    %v358 = vsub.f32 %v101, %v294
    %v359 = vsub.f32 %v102, %v295
    %v360 = vsub.f32 %v103, %v296
    %v361 = vsub.f32 %v104, %v297
    %v362 = vsub.f32 %v105, %v298
    %v363 = vsub.f32 %v106, %v299
    %v364 = vsub.f32 %v107, %v300
    %v365 = vsub.f32 %v108, %v301
    %v366 = vsub.f32 %v109, %v302
    %v367 = vsub.f32 %v110, %v303
    %v368 = vsub.f32 %v111, %v304
    %v369 = vsub.f32 %v112, %v305
    %v370 = vsub.f32 %v113, %v306
    %v371 = vmul.f32 %v307, %v307
    %v372 = vmul.f32 %v308, %v308
    %v373 = vmul.f32 %v309, %v309
    %v374 = vmul.f32 %v310, %v310
    %v375 = vmul.f32 %v311, %v311
    %v376 = vmul.f32 %v312, %v312
    %v377 = vmul.f32 %v313, %v313
    %v378 = vmul.f32 %v314, %v314
    %v379 = vmul.f32 %v315, %v315
    %v380 = vmul.f32 %v316, %v316
    %v381 = vmul.f32 %v317, %v317
    %v382 = vmul.f32 %v318, %v318
    %v383 = vmul.f32 %v319, %v319
    %v384 = vmul.f32 %v320, %v320
    %v385 = vmul.f32 %v321, %v321
    %v386 = vmul.f32 %v322, %v322
    %v387 = vmul.f32 %v323, %v323
    %v388 = vmul.f32 %v324, %v324
    %v389 = vmul.f32 %v325, %v325
    %v390 = vmul.f32 %v326, %v326
    %v391 = vmul.f32 %v327, %v327
    %v392 = vmul.f32 %v328, %v328
    %v393 = vmul.f32 %v329, %v329
    %v394 = vmul.f32 %v330, %v330
    %v395 = vmul.f32 %v331, %v331
    %v396 = vmul.f32 %v332, %v332
    %v397 = vmul.f32 %v333, %v333
    %v398 = vmul.f32 %v334, %v334
    %v399 = vmul.f32 %v335, %v335
    %v400 = vmul.f32 %v336, %v336
    %v401 = vmul.f32 %v337, %v337
    %v402 = vmul.f32 %v338, %v338
    %v403 = vmul.f32 %v339, %v339
    %v404 = vmul.f32 %v340, %v340
    %v405 = vmul.f32 %v341, %v341
    %v406 = vmul.f32 %v342, %v342
    %v407 = vmul.f32 %v343, %v343
    %v408 = vmul.f32 %v344, %v344
    %v409 = vmul.f32 %v345, %v345
    %v410 = vmul.f32 %v346, %v346
    %v411 = vmul.f32 %v347, %v347
    %v412 = vmul.f32 %v348, %v348
    %v413 = vmul.f32 %v349, %v349
    %v414 = vmul.f32 %v350, %v350
    %v415 = vmul.f32 %v351, %v351
    %v416 = vmul.f32 %v352, %v352
    %v417 = vmul.f32 %v353, %v353
    %v418 = vmul.f32 %v354, %v354
    %v419 = vmul.f32 %v355, %v355
    %v420 = vmul.f32 %v356, %v356
    %v421 = vmul.f32 %v357, %v357
    %v422 = vmul.f32 %v358, %v358
    %v423 = vmul.f32 %v359, %v359
    %v424 = vmul.f32 %v360, %v360
    %v425 = vmul.f32 %v361, %v361
    %v426 = vmul.f32 %v362, %v362
    %v427 = vmul.f32 %v363, %v363
    %v428 = vmul.f32 %v364, %v364
    %v429 = vmul.f32 %v365, %v365
    %v430 = vmul.f32 %v366, %v366
    %v431 = vmul.f32 %v367, %v367
    %v432 = vmul.f32 %v368, %v368
    %v433 = vmul.f32 %v369, %v369
    %v434 = vmul.f32 %v370, %v370
    %435 = vadd.xlane.f32.xlu0 %v371
    %v436 = vpop.xlane.xlu0 %435
    %437 = vadd.xlane.f32.xlu0 %v372
    %v438 = vpop.xlane.xlu0 %437
    %439 = vadd.xlane.f32.xlu0 %v373
    %v440 = vpop.xlane.xlu0 %439
    %441 = vadd.xlane.f32.xlu0 %v374
    %v442 = vpop.xlane.xlu0 %441
    %443 = vadd.xlane.f32.xlu0 %v375
    %v444 = vpop.xlane.xlu0 %443
    %445 = vadd.xlane.f32.xlu0 %v376
    %v446 = vpop.xlane.xlu0 %445
    %447 = vadd.xlane.f32.xlu0 %v377
    %v448 = vpop.xlane.xlu0 %447
    %449 = vadd.xlane.f32.xlu0 %v378
    %v450 = vpop.xlane.xlu0 %449
    %451 = vadd.xlane.f32.xlu0 %v379
    %v452 = vpop.xlane.xlu0 %451
    %453 = vadd.xlane.f32.xlu0 %v380
    %v454 = vpop.xlane.xlu0 %453
    %455 = vadd.xlane.f32.xlu0 %v381
    %v456 = vpop.xlane.xlu0 %455
    %457 = vadd.xlane.f32.xlu0 %v382
    %v458 = vpop.xlane.xlu0 %457
    %459 = vadd.xlane.f32.xlu0 %v383
    %v460 = vpop.xlane.xlu0 %459
    %461 = vadd.xlane.f32.xlu0 %v384
    %v462 = vpop.xlane.xlu0 %461
    %463 = vadd.xlane.f32.xlu0 %v385
    %v464 = vpop.xlane.xlu0 %463
    %465 = vadd.xlane.f32.xlu0 %v386
    %v466 = vpop.xlane.xlu0 %465
    %467 = vadd.xlane.f32.xlu0 %v387
    %v468 = vpop.xlane.xlu0 %467
    %469 = vadd.xlane.f32.xlu0 %v388
    %v470 = vpop.xlane.xlu0 %469
    %471 = vadd.xlane.f32.xlu0 %v389
    %v472 = vpop.xlane.xlu0 %471
    %473 = vadd.xlane.f32.xlu0 %v390
    %v474 = vpop.xlane.xlu0 %473
    %475 = vadd.xlane.f32.xlu0 %v391
    %v476 = vpop.xlane.xlu0 %475
    %477 = vadd.xlane.f32.xlu0 %v392
    %v478 = vpop.xlane.xlu0 %477
    %479 = vadd.xlane.f32.xlu0 %v393
    %v480 = vpop.xlane.xlu0 %479
    %481 = vadd.xlane.f32.xlu0 %v394
    %v482 = vpop.xlane.xlu0 %481
    %483 = vadd.xlane.f32.xlu0 %v395
    %v484 = vpop.xlane.xlu0 %483
    %485 = vadd.xlane.f32.xlu0 %v396
    %v486 = vpop.xlane.xlu0 %485
    %487 = vadd.xlane.f32.xlu0 %v397
    %v488 = vpop.xlane.xlu0 %487
    %489 = vadd.xlane.f32.xlu0 %v398
    %v490 = vpop.xlane.xlu0 %489
    %491 = vadd.xlane.f32.xlu0 %v399
    %v492 = vpop.xlane.xlu0 %491
    %493 = vadd.xlane.f32.xlu0 %v400
    %v494 = vpop.xlane.xlu0 %493
    %495 = vadd.xlane.f32.xlu0 %v401
    %v496 = vpop.xlane.xlu0 %495
    %497 = vadd.xlane.f32.xlu0 %v402
    %v498 = vpop.xlane.xlu0 %497
    %499 = vadd.xlane.f32.xlu0 %v403
    %v500 = vpop.xlane.xlu0 %499
    %501 = vadd.xlane.f32.xlu0 %v404
    %v502 = vpop.xlane.xlu0 %501
    %503 = vadd.xlane.f32.xlu0 %v405
    %v504 = vpop.xlane.xlu0 %503
    %505 = vadd.xlane.f32.xlu0 %v406
    %v506 = vpop.xlane.xlu0 %505
    %507 = vadd.xlane.f32.xlu0 %v407
    %v508 = vpop.xlane.xlu0 %507
    %509 = vadd.xlane.f32.xlu0 %v408
    %v510 = vpop.xlane.xlu0 %509
    %511 = vadd.xlane.f32.xlu0 %v409
    %v512 = vpop.xlane.xlu0 %511
    %513 = vadd.xlane.f32.xlu0 %v410
    %v514 = vpop.xlane.xlu0 %513
    %515 = vadd.xlane.f32.xlu0 %v411
    %v516 = vpop.xlane.xlu0 %515
    %517 = vadd.xlane.f32.xlu0 %v412
    %v518 = vpop.xlane.xlu0 %517
    %519 = vadd.xlane.f32.xlu0 %v413
    %v520 = vpop.xlane.xlu0 %519
    %521 = vadd.xlane.f32.xlu0 %v414
    %v522 = vpop.xlane.xlu0 %521
    %523 = vadd.xlane.f32.xlu0 %v415
    %v524 = vpop.xlane.xlu0 %523
    %525 = vadd.xlane.f32.xlu0 %v416
    %v526 = vpop.xlane.xlu0 %525
    %527 = vadd.xlane.f32.xlu0 %v417
    %v528 = vpop.xlane.xlu0 %527
    %529 = vadd.xlane.f32.xlu0 %v418
    %v530 = vpop.xlane.xlu0 %529
    %531 = vadd.xlane.f32.xlu0 %v419
    %v532 = vpop.xlane.xlu0 %531
    %533 = vadd.xlane.f32.xlu0 %v420
    %v534 = vpop.xlane.xlu0 %533
    %535 = vadd.xlane.f32.xlu0 %v421
    %v536 = vpop.xlane.xlu0 %535
    %537 = vadd.xlane.f32.xlu0 %v422
    %v538 = vpop.xlane.xlu0 %537
    %539 = vadd.xlane.f32.xlu0 %v423
    %v540 = vpop.xlane.xlu0 %539
    %541 = vadd.xlane.f32.xlu0 %v424
    %v542 = vpop.xlane.xlu0 %541
    %543 = vadd.xlane.f32.xlu0 %v425
    %v544 = vpop.xlane.xlu0 %543
    %545 = vadd.xlane.f32.xlu0 %v426
    %v546 = vpop.xlane.xlu0 %545
    %547 = vadd.xlane.f32.xlu0 %v427
    %v548 = vpop.xlane.xlu0 %547
    %549 = vadd.xlane.f32.xlu0 %v428
    %v550 = vpop.xlane.xlu0 %549
    %551 = vadd.xlane.f32.xlu0 %v429
    %v552 = vpop.xlane.xlu0 %551
    %553 = vadd.xlane.f32.xlu0 %v430
    %v554 = vpop.xlane.xlu0 %553
    %555 = vadd.xlane.f32.xlu0 %v431
    %v556 = vpop.xlane.xlu0 %555
    %557 = vadd.xlane.f32.xlu0 %v432
    %v558 = vpop.xlane.xlu0 %557
    %559 = vadd.xlane.f32.xlu0 %v433
    %v560 = vpop.xlane.xlu0 %559
    %561 = vadd.xlane.f32.xlu0 %v434
    %v562 = vpop.xlane.xlu0 %561
    %v563 = vmul.f32 %v436, %v242
    %v564 = vmul.f32 %v438, %v242
    %v565 = vmul.f32 %v440, %v242
    %v566 = vmul.f32 %v442, %v242
    %v567 = vmul.f32 %v444, %v242
    %v568 = vmul.f32 %v446, %v242
    %v569 = vmul.f32 %v448, %v242
    %v570 = vmul.f32 %v450, %v242
    %v571 = vmul.f32 %v452, %v242
    %v572 = vmul.f32 %v454, %v242
    %v573 = vmul.f32 %v456, %v242
    %v574 = vmul.f32 %v458, %v242
    %v575 = vmul.f32 %v460, %v242
    %v576 = vmul.f32 %v462, %v242
    %v577 = vmul.f32 %v464, %v242
    %v578 = vmul.f32 %v466, %v242
    %v579 = vmul.f32 %v468, %v242
    %v580 = vmul.f32 %v470, %v242
    %v581 = vmul.f32 %v472, %v242
    %v582 = vmul.f32 %v474, %v242
    %v583 = vmul.f32 %v476, %v242
    %v584 = vmul.f32 %v478, %v242
    %v585 = vmul.f32 %v480, %v242
    %v586 = vmul.f32 %v482, %v242
    %v587 = vmul.f32 %v484, %v242
    %v588 = vmul.f32 %v486, %v242
    %v589 = vmul.f32 %v488, %v242
    %v590 = vmul.f32 %v490, %v242
    %v591 = vmul.f32 %v492, %v242
    %v592 = vmul.f32 %v494, %v242
    %v593 = vmul.f32 %v496, %v242
    %v594 = vmul.f32 %v498, %v242
    %v595 = vmul.f32 %v500, %v242
    %v596 = vmul.f32 %v502, %v242
    %v597 = vmul.f32 %v504, %v242
    %v598 = vmul.f32 %v506, %v242
    %v599 = vmul.f32 %v508, %v242
    %v600 = vmul.f32 %v510, %v242
    %v601 = vmul.f32 %v512, %v242
    %v602 = vmul.f32 %v514, %v242
    %v603 = vmul.f32 %v516, %v242
    %v604 = vmul.f32 %v518, %v242
    %v605 = vmul.f32 %v520, %v242
    %v606 = vmul.f32 %v522, %v242
    %v607 = vmul.f32 %v524, %v242
    %v608 = vmul.f32 %v526, %v242
    %v609 = vmul.f32 %v528, %v242
    %v610 = vmul.f32 %v530, %v242
    %v611 = vmul.f32 %v532, %v242
    %v612 = vmul.f32 %v534, %v242
    %v613 = vmul.f32 %v536, %v242
    %v614 = vmul.f32 %v538, %v242
    %v615 = vmul.f32 %v540, %v242
    %v616 = vmul.f32 %v542, %v242
    %v617 = vmul.f32 %v544, %v242
    %v618 = vmul.f32 %v546, %v242
    %v619 = vmul.f32 %v548, %v242
    %v620 = vmul.f32 %v550, %v242
    %v621 = vmul.f32 %v552, %v242
    %v622 = vmul.f32 %v554, %v242
    %v623 = vmul.f32 %v556, %v242
    %v624 = vmul.f32 %v558, %v242
    %v625 = vmul.f32 %v560, %v242
    %v626 = vmul.f32 %v562, %v242
    %v627 = vadd.f32 %v563, 1e-05
    %v628 = vadd.f32 %v564, 1e-05
    %v629 = vadd.f32 %v565, 1e-05
    %v630 = vadd.f32 %v566, 1e-05
    %v631 = vadd.f32 %v567, 1e-05
    %v632 = vadd.f32 %v568, 1e-05
    %v633 = vadd.f32 %v569, 1e-05
    %v634 = vadd.f32 %v570, 1e-05
    %v635 = vadd.f32 %v571, 1e-05
    %v636 = vadd.f32 %v572, 1e-05
    %v637 = vadd.f32 %v573, 1e-05
    %v638 = vadd.f32 %v574, 1e-05
    %v639 = vadd.f32 %v575, 1e-05
    %v640 = vadd.f32 %v576, 1e-05
    %v641 = vadd.f32 %v577, 1e-05
    %v642 = vadd.f32 %v578, 1e-05
    %v643 = vadd.f32 %v579, 1e-05
    %v644 = vadd.f32 %v580, 1e-05
    %v645 = vadd.f32 %v581, 1e-05
    %v646 = vadd.f32 %v582, 1e-05
    %v647 = vadd.f32 %v583, 1e-05
    %v648 = vadd.f32 %v584, 1e-05
    %v649 = vadd.f32 %v585, 1e-05
    %v650 = vadd.f32 %v586, 1e-05
    %v651 = vadd.f32 %v587, 1e-05
    %v652 = vadd.f32 %v588, 1e-05
    %v653 = vadd.f32 %v589, 1e-05
    %v654 = vadd.f32 %v590, 1e-05
    %v655 = vadd.f32 %v591, 1e-05
    %v656 = vadd.f32 %v592, 1e-05
    %v657 = vadd.f32 %v593, 1e-05
    %v658 = vadd.f32 %v594, 1e-05
    %v659 = vadd.f32 %v595, 1e-05
    %v660 = vadd.f32 %v596, 1e-05
    %v661 = vadd.f32 %v597, 1e-05
    %v662 = vadd.f32 %v598, 1e-05
    %v663 = vadd.f32 %v599, 1e-05
    %v664 = vadd.f32 %v600, 1e-05
    %v665 = vadd.f32 %v601, 1e-05
    %v666 = vadd.f32 %v602, 1e-05
    %v667 = vadd.f32 %v603, 1e-05
    %v668 = vadd.f32 %v604, 1e-05
    %v669 = vadd.f32 %v605, 1e-05
    %v670 = vadd.f32 %v606, 1e-05
    %v671 = vadd.f32 %v607, 1e-05
    %v672 = vadd.f32 %v608, 1e-05
    %v673 = vadd.f32 %v609, 1e-05
    %v674 = vadd.f32 %v610, 1e-05
    %v675 = vadd.f32 %v611, 1e-05
    %v676 = vadd.f32 %v612, 1e-05
    %v677 = vadd.f32 %v613, 1e-05
    %v678 = vadd.f32 %v614, 1e-05
    %v679 = vadd.f32 %v615, 1e-05
    %v680 = vadd.f32 %v616, 1e-05
    %v681 = vadd.f32 %v617, 1e-05
    %v682 = vadd.f32 %v618, 1e-05
    %v683 = vadd.f32 %v619, 1e-05
    %v684 = vadd.f32 %v620, 1e-05
    %v685 = vadd.f32 %v621, 1e-05
    %v686 = vadd.f32 %v622, 1e-05
    %v687 = vadd.f32 %v623, 1e-05
    %v688 = vadd.f32 %v624, 1e-05
    %v689 = vadd.f32 %v625, 1e-05
    %v690 = vadd.f32 %v626, 1e-05
    %v691 = vrsqrt.pop %v627
    %v692 = vrsqrt.pop %v628
    %v693 = vrsqrt.pop %v629
    %v694 = vrsqrt.pop %v630
    %v695 = vrsqrt.pop %v631
    %v696 = vrsqrt.pop %v632
    %v697 = vrsqrt.pop %v633
    %v698 = vrsqrt.pop %v634
    %v699 = vrsqrt.pop %v635
    %v700 = vrsqrt.pop %v636
    %v701 = vrsqrt.pop %v637
    %v702 = vrsqrt.pop %v638
    %v703 = vrsqrt.pop %v639
    %v704 = vrsqrt.pop %v640
    %v705 = vrsqrt.pop %v641
    %v706 = vrsqrt.pop %v642
    %v707 = vrsqrt.pop %v643
    %v708 = vrsqrt.pop %v644
    %v709 = vrsqrt.pop %v645
    %v710 = vrsqrt.pop %v646
    %v711 = vrsqrt.pop %v647
    %v712 = vrsqrt.pop %v648
    %v713 = vrsqrt.pop %v649
    %v714 = vrsqrt.pop %v650
    %v715 = vrsqrt.pop %v651
    %v716 = vrsqrt.pop %v652
    %v717 = vrsqrt.pop %v653
    %v718 = vrsqrt.pop %v654
    %v719 = vrsqrt.pop %v655
    %v720 = vrsqrt.pop %v656
    %v721 = vrsqrt.pop %v657
    %v722 = vrsqrt.pop %v658
    %v723 = vrsqrt.pop %v659
    %v724 = vrsqrt.pop %v660
    %v725 = vrsqrt.pop %v661
    %v726 = vrsqrt.pop %v662
    %v727 = vrsqrt.pop %v663
    %v728 = vrsqrt.pop %v664
    %v729 = vrsqrt.pop %v665
    %v730 = vrsqrt.pop %v666
    %v731 = vrsqrt.pop %v667
    %v732 = vrsqrt.pop %v668
    %v733 = vrsqrt.pop %v669
    %v734 = vrsqrt.pop %v670
    %v735 = vrsqrt.pop %v671
    %v736 = vrsqrt.pop %v672
    %v737 = vrsqrt.pop %v673
    %v738 = vrsqrt.pop %v674
    %v739 = vrsqrt.pop %v675
    %v740 = vrsqrt.pop %v676
    %v741 = vrsqrt.pop %v677
    %v742 = vrsqrt.pop %v678
    %v743 = vrsqrt.pop %v679
    %v744 = vrsqrt.pop %v680
    %v745 = vrsqrt.pop %v681
    %v746 = vrsqrt.pop %v682
    %v747 = vrsqrt.pop %v683
    %v748 = vrsqrt.pop %v684
    %v749 = vrsqrt.pop %v685
    %v750 = vrsqrt.pop %v686
    %v751 = vrsqrt.pop %v687
    %v752 = vrsqrt.pop %v688
    %v753 = vrsqrt.pop %v689
    %v754 = vrsqrt.pop %v690
    %v755 = vld [vmem:[%s1] sm:$0x1]
    %v756 = vld [vmem:[%s2] sm:$0x1]
    %v757 = vmul.f32 %v307, %v691
    %v758 = vmul.f32 %v308, %v692
    %v759 = vmul.f32 %v309, %v693
    %v760 = vmul.f32 %v310, %v694
    %v761 = vmul.f32 %v311, %v695
    %v762 = vmul.f32 %v312, %v696
    %v763 = vmul.f32 %v313, %v697
    %v764 = vmul.f32 %v314, %v698
    %v765 = vmul.f32 %v315, %v699
    %v766 = vmul.f32 %v316, %v700
    %v767 = vmul.f32 %v317, %v701
    %v768 = vmul.f32 %v318, %v702
    %v769 = vmul.f32 %v319, %v703
    %v770 = vmul.f32 %v320, %v704
    %v771 = vmul.f32 %v321, %v705
    %v772 = vmul.f32 %v322, %v706
    %v773 = vmul.f32 %v323, %v707
    %v774 = vmul.f32 %v324, %v708
    %v775 = vmul.f32 %v325, %v709
    %v776 = vmul.f32 %v326, %v710
    %v777 = vmul.f32 %v327, %v711
    %v778 = vmul.f32 %v328, %v712
    %v779 = vmul.f32 %v329, %v713
    %v780 = vmul.f32 %v330, %v714
    %v781 = vmul.f32 %v331, %v715
    %v782 = vmul.f32 %v332, %v716
    %v783 = vmul.f32 %v333, %v717
    %v784 = vmul.f32 %v334, %v718
    %v785 = vmul.f32 %v335, %v719
    %v786 = vmul.f32 %v336, %v720
    %v787 = vmul.f32 %v337, %v721
    %v788 = vmul.f32 %v338, %v722
    %v789 = vmul.f32 %v339, %v723
    %v790 = vmul.f32 %v340, %v724
    %v791 = vmul.f32 %v341, %v725
    %v792 = vmul.f32 %v342, %v726
    %v793 = vmul.f32 %v343, %v727
    %v794 = vmul.f32 %v344, %v728
    %v795 = vmul.f32 %v345, %v729
    %v796 = vmul.f32 %v346, %v730
    %v797 = vmul.f32 %v347, %v731
    %v798 = vmul.f32 %v348, %v732
    %v799 = vmul.f32 %v349, %v733
    %v800 = vmul.f32 %v350, %v734
    %v801 = vmul.f32 %v351, %v735
    %v802 = vmul.f32 %v352, %v736
    %v803 = vmul.f32 %v353, %v737
    %v804 = vmul.f32 %v354, %v738
    %v805 = vmul.f32 %v355, %v739
    %v806 = vmul.f32 %v356, %v740
    %v807 = vmul.f32 %v357, %v741
    %v808 = vmul.f32 %v358, %v742
    %v809 = vmul.f32 %v359, %v743
    %v810 = vmul.f32 %v360, %v744
    %v811 = vmul.f32 %v361, %v745
    %v812 = vmul.f32 %v362, %v746
    %v813 = vmul.f32 %v363, %v747
    %v814 = vmul.f32 %v364, %v748
    %v815 = vmul.f32 %v365, %v749
    %v816 = vmul.f32 %v366, %v750
    %v817 = vmul.f32 %v367, %v751
    %v818 = vmul.f32 %v368, %v752
    %v819 = vmul.f32 %v369, %v753
    %v820 = vmul.f32 %v370, %v754
    %v822 = vlaneseq
    %v823 = vshrl.u32 %v822, 7
    %v824 = vsub.s32 0, %v823
    %v825 = vrot.slane %v755, %v824
    %v827 = vmul.f32 %v757, %v825
    %v828 = vmul.f32 %v758, %v825
    %v829 = vmul.f32 %v759, %v825
    %v830 = vmul.f32 %v760, %v825
    %v831 = vmul.f32 %v761, %v825
    %v832 = vmul.f32 %v762, %v825
    %v833 = vmul.f32 %v763, %v825
    %v834 = vmul.f32 %v764, %v825
    %v835 = vmul.f32 %v765, %v825
    %v836 = vmul.f32 %v766, %v825
    %v837 = vmul.f32 %v767, %v825
    %v838 = vmul.f32 %v768, %v825
    %v839 = vmul.f32 %v769, %v825
    %v840 = vmul.f32 %v770, %v825
    %v841 = vmul.f32 %v771, %v825
    %v842 = vmul.f32 %v772, %v825
    %v843 = vmul.f32 %v773, %v825
    %v844 = vmul.f32 %v774, %v825
    %v845 = vmul.f32 %v775, %v825
    %v846 = vmul.f32 %v776, %v825
    %v847 = vmul.f32 %v777, %v825
    %v848 = vmul.f32 %v778, %v825
    %v849 = vmul.f32 %v779, %v825
    %v850 = vmul.f32 %v780, %v825
    %v851 = vmul.f32 %v781, %v825
    %v852 = vmul.f32 %v782, %v825
    %v853 = vmul.f32 %v783, %v825
    %v854 = vmul.f32 %v784, %v825
    %v855 = vmul.f32 %v785, %v825
    %v856 = vmul.f32 %v786, %v825
    %v857 = vmul.f32 %v787, %v825
    %v858 = vmul.f32 %v788, %v825
    %v859 = vmul.f32 %v789, %v825
    %v860 = vmul.f32 %v790, %v825
    %v861 = vmul.f32 %v791, %v825
    %v862 = vmul.f32 %v792, %v825
    %v863 = vmul.f32 %v793, %v825
    %v864 = vmul.f32 %v794, %v825
    %v865 = vmul.f32 %v795, %v825
    %v866 = vmul.f32 %v796, %v825
    %v867 = vmul.f32 %v797, %v825
    %v868 = vmul.f32 %v798, %v825
    %v869 = vmul.f32 %v799, %v825
    %v870 = vmul.f32 %v800, %v825
    %v871 = vmul.f32 %v801, %v825
    %v872 = vmul.f32 %v802, %v825
    %v873 = vmul.f32 %v803, %v825
    %v874 = vmul.f32 %v804, %v825
    %v875 = vmul.f32 %v805, %v825
    %v876 = vmul.f32 %v806, %v825
    %v877 = vmul.f32 %v807, %v825
    %v878 = vmul.f32 %v808, %v825
    %v879 = vmul.f32 %v809, %v825
    %v880 = vmul.f32 %v810, %v825
    %v881 = vmul.f32 %v811, %v825
    %v882 = vmul.f32 %v812, %v825
    %v883 = vmul.f32 %v813, %v825
    %v884 = vmul.f32 %v814, %v825
    %v885 = vmul.f32 %v815, %v825
    %v886 = vmul.f32 %v816, %v825
    %v887 = vmul.f32 %v817, %v825
    %v888 = vmul.f32 %v818, %v825
    %v889 = vmul.f32 %v819, %v825
    %v890 = vmul.f32 %v820, %v825
    %v892 = vlaneseq
    %v893 = vshrl.u32 %v892, 7
    %v894 = vsub.s32 0, %v893
    %v895 = vrot.slane %v756, %v894
    %v897 = vadd.f32 %v827, %v895
    %v898 = vadd.f32 %v828, %v895
    %v899 = vadd.f32 %v829, %v895
    %v900 = vadd.f32 %v830, %v895
    %v901 = vadd.f32 %v831, %v895
    %v902 = vadd.f32 %v832, %v895
    %v903 = vadd.f32 %v833, %v895
    %v904 = vadd.f32 %v834, %v895
    %v905 = vadd.f32 %v835, %v895
    %v906 = vadd.f32 %v836, %v895
    %v907 = vadd.f32 %v837, %v895
    %v908 = vadd.f32 %v838, %v895
    %v909 = vadd.f32 %v839, %v895
    %v910 = vadd.f32 %v840, %v895
    %v911 = vadd.f32 %v841, %v895
    %v912 = vadd.f32 %v842, %v895
    %v913 = vadd.f32 %v843, %v895
    %v914 = vadd.f32 %v844, %v895
    %v915 = vadd.f32 %v845, %v895
    %v916 = vadd.f32 %v846, %v895
    %v917 = vadd.f32 %v847, %v895
    %v918 = vadd.f32 %v848, %v895
    %v919 = vadd.f32 %v849, %v895
    %v920 = vadd.f32 %v850, %v895
    %v921 = vadd.f32 %v851, %v895
    %v922 = vadd.f32 %v852, %v895
    %v923 = vadd.f32 %v853, %v895
    %v924 = vadd.f32 %v854, %v895
    %v925 = vadd.f32 %v855, %v895
    %v926 = vadd.f32 %v856, %v895
    %v927 = vadd.f32 %v857, %v895
    %v928 = vadd.f32 %v858, %v895
    %v929 = vadd.f32 %v859, %v895
    %v930 = vadd.f32 %v860, %v895
    %v931 = vadd.f32 %v861, %v895
    %v932 = vadd.f32 %v862, %v895
    %v933 = vadd.f32 %v863, %v895
    %v934 = vadd.f32 %v864, %v895
    %v935 = vadd.f32 %v865, %v895
    %v936 = vadd.f32 %v866, %v895
    %v937 = vadd.f32 %v867, %v895
    %v938 = vadd.f32 %v868, %v895
    %v939 = vadd.f32 %v869, %v895
    %v940 = vadd.f32 %v870, %v895
    %v941 = vadd.f32 %v871, %v895
    %v942 = vadd.f32 %v872, %v895
    %v943 = vadd.f32 %v873, %v895
    %v944 = vadd.f32 %v874, %v895
    %v945 = vadd.f32 %v875, %v895
    %v946 = vadd.f32 %v876, %v895
    %v947 = vadd.f32 %v877, %v895
    %v948 = vadd.f32 %v878, %v895
    %v949 = vadd.f32 %v879, %v895
    %v950 = vadd.f32 %v880, %v895
    %v951 = vadd.f32 %v881, %v895
    %v952 = vadd.f32 %v882, %v895
    %v953 = vadd.f32 %v883, %v895
    %v954 = vadd.f32 %v884, %v895
    %v955 = vadd.f32 %v885, %v895
    %v956 = vadd.f32 %v886, %v895
    %v957 = vadd.f32 %v887, %v895
    %v958 = vadd.f32 %v888, %v895
    %v959 = vadd.f32 %v889, %v895
    %v960 = vadd.f32 %v890, %v895
    %v961 = vpack.c.bf16 %v898, %v897
    %v962 = vpack.c.bf16 %v900, %v899
    %v963 = vpack.c.bf16 %v902, %v901
    %v964 = vpack.c.bf16 %v904, %v903
    %v965 = vpack.c.bf16 %v906, %v905
    %v966 = vpack.c.bf16 %v908, %v907
    %v967 = vpack.c.bf16 %v910, %v909
    %v968 = vpack.c.bf16 %v912, %v911
    %v969 = vpack.c.bf16 %v914, %v913
    %v970 = vpack.c.bf16 %v916, %v915
    %v971 = vpack.c.bf16 %v918, %v917
    %v972 = vpack.c.bf16 %v920, %v919
    %v973 = vpack.c.bf16 %v922, %v921
    %v974 = vpack.c.bf16 %v924, %v923
    %v975 = vpack.c.bf16 %v926, %v925
    %v976 = vpack.c.bf16 %v928, %v927
    %v977 = vpack.c.bf16 %v930, %v929
    %v978 = vpack.c.bf16 %v932, %v931
    %v979 = vpack.c.bf16 %v934, %v933
    %v980 = vpack.c.bf16 %v936, %v935
    %v981 = vpack.c.bf16 %v938, %v937
    %v982 = vpack.c.bf16 %v940, %v939
    %v983 = vpack.c.bf16 %v942, %v941
    %v984 = vpack.c.bf16 %v944, %v943
    %v985 = vpack.c.bf16 %v946, %v945
    %v986 = vpack.c.bf16 %v948, %v947
    %v987 = vpack.c.bf16 %v950, %v949
    %v988 = vpack.c.bf16 %v952, %v951
    %v989 = vpack.c.bf16 %v954, %v953
    %v990 = vpack.c.bf16 %v956, %v955
    %v991 = vpack.c.bf16 %v958, %v957
    %v992 = vpack.c.bf16 %v960, %v959
    %v993 = vld [vmem:[#allocation5] sm:$0xf]
    %v994 = vld [vmem:[#allocation5 + $0x4] sm:$0xf]
    %v995 = vld [vmem:[#allocation5 + $0x8] sm:$0xf]
    %v996 = vld [vmem:[#allocation5 + $0xc] sm:$0xf]
    %v997 = vld [vmem:[#allocation5 + $0x10] sm:$0xf]
    %v998 = vld [vmem:[#allocation5 + $0x14] sm:$0xf]
    %v999 = vld [vmem:[#allocation5 + $0x18] sm:$0xf]
    %v1000 = vld [vmem:[#allocation5 + $0x1c] sm:$0xf]
    %v1001 = vld [vmem:[#allocation5 + $0x20] sm:$0xf]
    %v1002 = vld [vmem:[#allocation5 + $0x24] sm:$0xf]
    %v1003 = vld [vmem:[#allocation5 + $0x28] sm:$0xf]
    %v1004 = vld [vmem:[#allocation5 + $0x2c] sm:$0xf]
    %v1005 = vld [vmem:[#allocation5 + $0x30] sm:$0xf]
    %v1006 = vld [vmem:[#allocation5 + $0x34] sm:$0xf]
    %v1007 = vld [vmem:[#allocation5 + $0x38] sm:$0xf]
    %v1008 = vld [vmem:[#allocation5 + $0x3c] sm:$0xf]
    %v1009 = vld [vmem:[%s4] sm:$0x1]
    %v1011 = vlaneseq
    %v1012 = vshrl.u32 %v1011, 7
    %v1013 = vsub.s32 0, %v1012
    %v1014 = vrot.slane %v1009, %v1013
    %v1032 = vunpack.c.l.b16 %v993
    %v1033 = vunpack.c.l.b16 %v994
    %v1034 = vunpack.c.l.b16 %v995
    %v1035 = vunpack.c.l.b16 %v996
    %v1036 = vunpack.c.l.b16 %v997
    %v1037 = vunpack.c.l.b16 %v998
    %v1038 = vunpack.c.l.b16 %v999
    %v1039 = vunpack.c.l.b16 %v1000
    %v1040 = vunpack.c.l.b16 %v1001
    %v1041 = vunpack.c.l.b16 %v1002
    %v1042 = vunpack.c.l.b16 %v1003
    %v1043 = vunpack.c.l.b16 %v1004
    %v1044 = vunpack.c.l.b16 %v1005
    %v1045 = vunpack.c.l.b16 %v1006
    %v1046 = vunpack.c.l.b16 %v1007
    %v1047 = vunpack.c.l.b16 %v1008
    %v1048 = vpack.c.b16 %v1033, %v1032
    %v1049 = vpack.c.b16 %v1035, %v1034
    %v1050 = vpack.c.b16 %v1037, %v1036
    %v1051 = vpack.c.b16 %v1039, %v1038
    %v1052 = vpack.c.b16 %v1041, %v1040
    %v1053 = vpack.c.b16 %v1043, %v1042
    %v1054 = vpack.c.b16 %v1045, %v1044
    %v1055 = vpack.c.b16 %v1047, %v1046
    %1064 = vmatprep.subr.bf16.mxu0 0
    %1065 = vmatpush1.bf16.msra.mxu0 %v1048
    %1066 = vmatprep.subr.bf16.mxu0 0
    %1067 = vmatpush1.bf16.msra.mxu0 %v1049
    %1068 = vmatprep.subr.bf16.mxu0 0
    %1069 = vmatpush1.bf16.msra.mxu0 %v1050
    %1070 = vmatprep.subr.bf16.mxu0 0
    %1071 = vmatpush1.bf16.msra.mxu0 %v1051
    %1072 = vmatprep.subr.bf16.mxu0 0
    %1073 = vmatpush1.bf16.msra.mxu0 %v1052
    %1074 = vmatprep.subr.bf16.mxu0 0
    %1075 = vmatpush1.bf16.msra.mxu0 %v1053
    %1076 = vmatprep.subr.bf16.mxu0 0
    %1077 = vmatpush1.bf16.msra.mxu0 %v1054
    %1078 = vmatprep.subr.bf16.mxu0 0
    %1079 = vmatpush1.bf16.msra.mxu0 %v1055
    %1080 = vmatprep.subr.bf16.mxu0 0
    %1081 = vmatpush1.bf16.msra.mxu0 0
    %1082 = vmatprep.subr.bf16.mxu0 0
    %1083 = vmatpush1.bf16.msra.mxu0 0
    %1084 = vmatprep.subr.bf16.mxu0 0
    %1085 = vmatpush1.bf16.msra.mxu0 0
    %1086 = vmatprep.subr.bf16.mxu0 0
    %1087 = vmatpush1.bf16.msra.mxu0 0
    %1088 = vmatprep.subr.bf16.mxu0 0
    %1089 = vmatpush1.bf16.msra.mxu0 0
    %1090 = vmatprep.subr.bf16.mxu0 0
    %1091 = vmatpush1.bf16.msra.mxu0 0
    %1092 = vmatprep.subr.bf16.mxu0 0
    %1093 = vmatpush1.bf16.msra.mxu0 0
    %1094 = vmatprep.subr.bf16.mxu0 0
    %1095 = vmatpush1.bf16.msra.mxu0 0
    %1096 = vmatprep.mubr.bf16.mxu0 0
    %1097 = vmatmul.mubr.bf16.gmra.mrb[0].mxu0 %v961
    %v1098 = vpop.f32.mrb[0].mxu0
    %v1099 = vadd.f32 %v1014, %v1098
    %v1100 = vpop.f32.mrb[0].mxu0
    %v1101 = vpop.f32.mrb[0].mxu0
    %v1102 = vadd.f32 %v1014, %v1101
    %v1103 = vpop.f32.mrb[0].mxu0
    %1104 = vmatprep.mubr.bf16.mxu0 0
    %1105 = vmatmul.mubr.bf16.gmra.mrb[0].mxu0 %v962
    %v1106 = vpop.f32.mrb[0].mxu0
    %v1107 = vadd.f32 %v1014, %v1106
    %v1108 = vpop.f32.mrb[0].mxu0
    %v1109 = vpop.f32.mrb[0].mxu0
    %v1110 = vadd.f32 %v1014, %v1109
    %v1111 = vpop.f32.mrb[0].mxu0
    %1112 = vmatprep.mubr.bf16.mxu0 0
    %1113 = vmatmul.mubr.bf16.gmra.mrb[0].mxu0 %v963
    %v1114 = vpop.f32.mrb[0].mxu0
    %v1115 = vadd.f32 %v1014, %v1114
    %v1116 = vpop.f32.mrb[0].mxu0
    %v1117 = vpop.f32.mrb[0].mxu0
    %v1118 = vadd.f32 %v1014, %v1117
    %v1119 = vpop.f32.mrb[0].mxu0
    %1120 = vmatprep.mubr.bf16.mxu0 0
    %1121 = vmatmul.mubr.bf16.gmra.mrb[0].mxu0 %v964
    %v1122 = vpop.f32.mrb[0].mxu0
    %v1123 = vadd.f32 %v1014, %v1122
    %v1124 = vpop.f32.mrb[0].mxu0
    %v1125 = vpop.f32.mrb[0].mxu0
    %v1126 = vadd.f32 %v1014, %v1125
    %v1127 = vpop.f32.mrb[0].mxu0
    %1128 = vmatprep.mubr.bf16.mxu0 0
    %1129 = vmatmul.mubr.bf16.gmra.mrb[0].mxu0 %v965
    %v1130 = vpop.f32.mrb[0].mxu0
    %v1131 = vadd.f32 %v1014, %v1130
    %v1132 = vpop.f32.mrb[0].mxu0
    %v1133 = vpop.f32.mrb[0].mxu0
    %v1134 = vadd.f32 %v1014, %v1133
    %v1135 = vpop.f32.mrb[0].mxu0
    %1136 = vmatprep.mubr.bf16.mxu0 0
    %1137 = vmatmul.mubr.bf16.gmra.mrb[0].mxu0 %v966
    %v1138 = vpop.f32.mrb[0].mxu0
    %v1139 = vadd.f32 %v1014, %v1138
    %v1140 = vpop.f32.mrb[0].mxu0
    %v1141 = vpop.f32.mrb[0].mxu0
    %v1142 = vadd.f32 %v1014, %v1141
    %v1143 = vpop.f32.mrb[0].mxu0
    %1144 = vmatprep.mubr.bf16.mxu0 0
    %1145 = vmatmul.mubr.bf16.gmra.mrb[0].mxu0 %v967
    %v1146 = vpop.f32.mrb[0].mxu0
    %v1147 = vadd.f32 %v1014, %v1146
    %v1148 = vpop.f32.mrb[0].mxu0
    %v1149 = vpop.f32.mrb[0].mxu0
    %v1150 = vadd.f32 %v1014, %v1149
    %v1151 = vpop.f32.mrb[0].mxu0
    %1152 = vmatprep.mubr.bf16.mxu0 0
    %1153 = vmatmul.mubr.bf16.gmra.mrb[0].mxu0 %v968
    %v1154 = vpop.f32.mrb[0].mxu0
    %v1155 = vadd.f32 %v1014, %v1154
    %v1156 = vpop.f32.mrb[0].mxu0
    %v1157 = vpop.f32.mrb[0].mxu0
    %v1158 = vadd.f32 %v1014, %v1157
    %v1159 = vpop.f32.mrb[0].mxu0
    %1160 = vmatprep.mubr.bf16.mxu0 0
    %1161 = vmatmul.mubr.bf16.gmra.mrb[0].mxu0 %v969
    %v1162 = vpop.f32.mrb[0].mxu0
    %v1163 = vadd.f32 %v1014, %v1162
    %v1164 = vpop.f32.mrb[0].mxu0
    %v1165 = vpop.f32.mrb[0].mxu0
    %v1166 = vadd.f32 %v1014, %v1165
    %v1167 = vpop.f32.mrb[0].mxu0
    %1168 = vmatprep.mubr.bf16.mxu0 0
    %1169 = vmatmul.mubr.bf16.gmra.mrb[0].mxu0 %v970
    %v1170 = vpop.f32.mrb[0].mxu0
    %v1171 = vadd.f32 %v1014, %v1170
    %v1172 = vpop.f32.mrb[0].mxu0
    %v1173 = vpop.f32.mrb[0].mxu0
    %v1174 = vadd.f32 %v1014, %v1173
    %v1175 = vpop.f32.mrb[0].mxu0
    %1176 = vmatprep.mubr.bf16.mxu0 0
    %1177 = vmatmul.mubr.bf16.gmra.mrb[0].mxu0 %v971
    %v1178 = vpop.f32.mrb[0].mxu0
    %v1179 = vadd.f32 %v1014, %v1178
    %v1180 = vpop.f32.mrb[0].mxu0
    %v1181 = vpop.f32.mrb[0].mxu0
    %v1182 = vadd.f32 %v1014, %v1181
    %v1183 = vpop.f32.mrb[0].mxu0
    %1184 = vmatprep.mubr.bf16.mxu0 0
    %1185 = vmatmul.mubr.bf16.gmra.mrb[0].mxu0 %v972
    %v1186 = vpop.f32.mrb[0].mxu0
    %v1187 = vadd.f32 %v1014, %v1186
    %v1188 = vpop.f32.mrb[0].mxu0
    %v1189 = vpop.f32.mrb[0].mxu0
    %v1190 = vadd.f32 %v1014, %v1189
    %v1191 = vpop.f32.mrb[0].mxu0
    %1192 = vmatprep.mubr.bf16.mxu0 0
    %1193 = vmatmul.mubr.bf16.gmra.mrb[0].mxu0 %v973
    %v1194 = vpop.f32.mrb[0].mxu0
    %v1195 = vadd.f32 %v1014, %v1194
    %v1196 = vpop.f32.mrb[0].mxu0
    %v1197 = vpop.f32.mrb[0].mxu0
    %v1198 = vadd.f32 %v1014, %v1197
    %v1199 = vpop.f32.mrb[0].mxu0
    %1200 = vmatprep.mubr.bf16.mxu0 0
    %1201 = vmatmul.mubr.bf16.gmra.mrb[0].mxu0 %v974
    %v1202 = vpop.f32.mrb[0].mxu0
    %v1203 = vadd.f32 %v1014, %v1202
    %v1204 = vpop.f32.mrb[0].mxu0
    %v1205 = vpop.f32.mrb[0].mxu0
    %v1206 = vadd.f32 %v1014, %v1205
    %v1207 = vpop.f32.mrb[0].mxu0
    %1208 = vmatprep.mubr.bf16.mxu0 0
    %1209 = vmatmul.mubr.bf16.gmra.mrb[0].mxu0 %v975
    %v1210 = vpop.f32.mrb[0].mxu0
    %v1211 = vadd.f32 %v1014, %v1210
    %v1212 = vpop.f32.mrb[0].mxu0
    %v1213 = vpop.f32.mrb[0].mxu0
    %v1214 = vadd.f32 %v1014, %v1213
    %v1215 = vpop.f32.mrb[0].mxu0
    %1216 = vmatprep.mubr.bf16.mxu0 0
    %1217 = vmatmul.mubr.bf16.gmra.mrb[0].mxu0 %v976
    %v1218 = vpop.f32.mrb[0].mxu0
    %v1219 = vadd.f32 %v1014, %v1218
    %v1220 = vpop.f32.mrb[0].mxu0
    %v1221 = vpop.f32.mrb[0].mxu0
    %v1222 = vadd.f32 %v1014, %v1221
    %v1223 = vpop.f32.mrb[0].mxu0
    %1224 = vmatprep.mubr.bf16.mxu0 0
    %1225 = vmatmul.mubr.bf16.gmra.mrb[0].mxu0 %v977
    %v1226 = vpop.f32.mrb[0].mxu0
    %v1227 = vadd.f32 %v1014, %v1226
    %v1228 = vpop.f32.mrb[0].mxu0
    %v1229 = vpop.f32.mrb[0].mxu0
    %v1230 = vadd.f32 %v1014, %v1229
    %v1231 = vpop.f32.mrb[0].mxu0
    %1232 = vmatprep.mubr.bf16.mxu0 0
    %1233 = vmatmul.mubr.bf16.gmra.mrb[0].mxu0 %v978
    %v1234 = vpop.f32.mrb[0].mxu0
    %v1235 = vadd.f32 %v1014, %v1234
    %v1236 = vpop.f32.mrb[0].mxu0
    %v1237 = vpop.f32.mrb[0].mxu0
    %v1238 = vadd.f32 %v1014, %v1237
    %v1239 = vpop.f32.mrb[0].mxu0
    %1240 = vmatprep.mubr.bf16.mxu0 0
    %1241 = vmatmul.mubr.bf16.gmra.mrb[0].mxu0 %v979
    %v1242 = vpop.f32.mrb[0].mxu0
    %v1243 = vadd.f32 %v1014, %v1242
    %v1244 = vpop.f32.mrb[0].mxu0
    %v1245 = vpop.f32.mrb[0].mxu0
    %v1246 = vadd.f32 %v1014, %v1245
    %v1247 = vpop.f32.mrb[0].mxu0
    %1248 = vmatprep.mubr.bf16.mxu0 0
    %1249 = vmatmul.mubr.bf16.gmra.mrb[0].mxu0 %v980
    %v1250 = vpop.f32.mrb[0].mxu0
    %v1251 = vadd.f32 %v1014, %v1250
    %v1252 = vpop.f32.mrb[0].mxu0
    %v1253 = vpop.f32.mrb[0].mxu0
    %v1254 = vadd.f32 %v1014, %v1253
    %v1255 = vpop.f32.mrb[0].mxu0
    %1256 = vmatprep.mubr.bf16.mxu0 0
    %1257 = vmatmul.mubr.bf16.gmra.mrb[0].mxu0 %v981
    %v1258 = vpop.f32.mrb[0].mxu0
    %v1259 = vadd.f32 %v1014, %v1258
    %v1260 = vpop.f32.mrb[0].mxu0
    %v1261 = vpop.f32.mrb[0].mxu0
    %v1262 = vadd.f32 %v1014, %v1261
    %v1263 = vpop.f32.mrb[0].mxu0
    %1264 = vmatprep.mubr.bf16.mxu0 0
    %1265 = vmatmul.mubr.bf16.gmra.mrb[0].mxu0 %v982
    %v1266 = vpop.f32.mrb[0].mxu0
    %v1267 = vadd.f32 %v1014, %v1266
    %v1268 = vpop.f32.mrb[0].mxu0
    %v1269 = vpop.f32.mrb[0].mxu0
    %v1270 = vadd.f32 %v1014, %v1269
    %v1271 = vpop.f32.mrb[0].mxu0
    %1272 = vmatprep.mubr.bf16.mxu0 0
    %1273 = vmatmul.mubr.bf16.gmra.mrb[0].mxu0 %v983
    %v1274 = vpop.f32.mrb[0].mxu0
    %v1275 = vadd.f32 %v1014, %v1274
    %v1276 = vpop.f32.mrb[0].mxu0
    %v1277 = vpop.f32.mrb[0].mxu0
    %v1278 = vadd.f32 %v1014, %v1277
    %v1279 = vpop.f32.mrb[0].mxu0
    %1280 = vmatprep.mubr.bf16.mxu0 0
    %1281 = vmatmul.mubr.bf16.gmra.mrb[0].mxu0 %v984
    %v1282 = vpop.f32.mrb[0].mxu0
    %v1283 = vadd.f32 %v1014, %v1282
    %v1284 = vpop.f32.mrb[0].mxu0
    %v1285 = vpop.f32.mrb[0].mxu0
    %v1286 = vadd.f32 %v1014, %v1285
    %v1287 = vpop.f32.mrb[0].mxu0
    %1288 = vmatprep.mubr.bf16.mxu0 0
    %1289 = vmatmul.mubr.bf16.gmra.mrb[0].mxu0 %v985
    %v1290 = vpop.f32.mrb[0].mxu0
    %v1291 = vadd.f32 %v1014, %v1290
    %v1292 = vpop.f32.mrb[0].mxu0
    %v1293 = vpop.f32.mrb[0].mxu0
    %v1294 = vadd.f32 %v1014, %v1293
    %v1295 = vpop.f32.mrb[0].mxu0
    %1296 = vmatprep.mubr.bf16.mxu0 0
    %1297 = vmatmul.mubr.bf16.gmra.mrb[0].mxu0 %v986
    %v1298 = vpop.f32.mrb[0].mxu0
    %v1299 = vadd.f32 %v1014, %v1298
    %v1300 = vpop.f32.mrb[0].mxu0
    %v1301 = vpop.f32.mrb[0].mxu0
    %v1302 = vadd.f32 %v1014, %v1301
    %v1303 = vpop.f32.mrb[0].mxu0
    %1304 = vmatprep.mubr.bf16.mxu0 0
    %1305 = vmatmul.mubr.bf16.gmra.mrb[0].mxu0 %v987
    %v1306 = vpop.f32.mrb[0].mxu0
    %v1307 = vadd.f32 %v1014, %v1306
    %v1308 = vpop.f32.mrb[0].mxu0
    %v1309 = vpop.f32.mrb[0].mxu0
    %v1310 = vadd.f32 %v1014, %v1309
    %v1311 = vpop.f32.mrb[0].mxu0
    %1312 = vmatprep.mubr.bf16.mxu0 0
    %1313 = vmatmul.mubr.bf16.gmra.mrb[0].mxu0 %v988
    %v1314 = vpop.f32.mrb[0].mxu0
    %v1315 = vadd.f32 %v1014, %v1314
    %v1316 = vpop.f32.mrb[0].mxu0
    %v1317 = vpop.f32.mrb[0].mxu0
    %v1318 = vadd.f32 %v1014, %v1317
    %v1319 = vpop.f32.mrb[0].mxu0
    %1320 = vmatprep.mubr.bf16.mxu0 0
    %1321 = vmatmul.mubr.bf16.gmra.mrb[0].mxu0 %v989
    %v1322 = vpop.f32.mrb[0].mxu0
    %v1323 = vadd.f32 %v1014, %v1322
    %v1324 = vpop.f32.mrb[0].mxu0
    %v1325 = vpop.f32.mrb[0].mxu0
    %v1326 = vadd.f32 %v1014, %v1325
    %v1327 = vpop.f32.mrb[0].mxu0
    %1328 = vmatprep.mubr.bf16.mxu0 0
    %1329 = vmatmul.mubr.bf16.gmra.mrb[0].mxu0 %v990
    %v1330 = vpop.f32.mrb[0].mxu0
    %v1331 = vadd.f32 %v1014, %v1330
    %v1332 = vpop.f32.mrb[0].mxu0
    %v1333 = vpop.f32.mrb[0].mxu0
    %v1334 = vadd.f32 %v1014, %v1333
    %v1335 = vpop.f32.mrb[0].mxu0
    %1336 = vmatprep.mubr.bf16.mxu0 0
    %1337 = vmatmul.mubr.bf16.gmra.mrb[0].mxu0 %v991
    %v1338 = vpop.f32.mrb[0].mxu0
    %v1339 = vadd.f32 %v1014, %v1338
    %v1340 = vpop.f32.mrb[0].mxu0
    %v1341 = vpop.f32.mrb[0].mxu0
    %v1342 = vadd.f32 %v1014, %v1341
    %v1343 = vpop.f32.mrb[0].mxu0
    %1344 = vmatprep.mubr.bf16.mxu0 0
    %1345 = vmatmul.mubr.bf16.gmra.mrb[0].mxu0 %v992
    %v1346 = vpop.f32.mrb[0].mxu0
    %v1347 = vadd.f32 %v1014, %v1346
    %v1348 = vpop.f32.mrb[0].mxu0
    %v1349 = vpop.f32.mrb[0].mxu0
    %v1350 = vadd.f32 %v1014, %v1349
    %v1351 = vpop.f32.mrb[0].mxu0
    %1352 = vdwg.mxu0
    %1353 = vst [vmem:[#allocation7] sm:$0xff] %v1099
    %1354 = vst [vmem:[#allocation7 + $0x8] sm:$0xff] %v1102
    %1355 = vst [vmem:[#allocation7 + $0x10] sm:$0xff] %v1107
    %1356 = vst [vmem:[#allocation7 + $0x18] sm:$0xff] %v1110
    %1357 = vst [vmem:[#allocation7 + $0x20] sm:$0xff] %v1115
    %1358 = vst [vmem:[#allocation7 + $0x28] sm:$0xff] %v1118
    %1359 = vst [vmem:[#allocation7 + $0x30] sm:$0xff] %v1123
    %1360 = vst [vmem:[#allocation7 + $0x38] sm:$0xff] %v1126
    %1361 = vst [vmem:[#allocation7 + $0x40] sm:$0xff] %v1131
    %1362 = vst [vmem:[#allocation7 + $0x48] sm:$0xff] %v1134
    %1363 = vst [vmem:[#allocation7 + $0x50] sm:$0xff] %v1139
    %1364 = vst [vmem:[#allocation7 + $0x58] sm:$0xff] %v1142
    %1365 = vst [vmem:[#allocation7 + $0x60] sm:$0xff] %v1147
    %1366 = vst [vmem:[#allocation7 + $0x68] sm:$0xff] %v1150
    %1367 = vst [vmem:[#allocation7 + $0x70] sm:$0xff] %v1155
    %1368 = vst [vmem:[#allocation7 + $0x78] sm:$0xff] %v1158
    %1369 = vst [vmem:[#allocation7 + $0x80] sm:$0xff] %v1163
    %1370 = vst [vmem:[#allocation7 + $0x88] sm:$0xff] %v1166
    %1371 = vst [vmem:[#allocation7 + $0x90] sm:$0xff] %v1171
    %1372 = vst [vmem:[#allocation7 + $0x98] sm:$0xff] %v1174
    %1373 = vst [vmem:[#allocation7 + $0xa0] sm:$0xff] %v1179
    %1374 = vst [vmem:[#allocation7 + $0xa8] sm:$0xff] %v1182
    %1375 = vst [vmem:[#allocation7 + $0xb0] sm:$0xff] %v1187
    %1376 = vst [vmem:[#allocation7 + $0xb8] sm:$0xff] %v1190
    %1377 = vst [vmem:[#allocation7 + $0xc0] sm:$0xff] %v1195
    %1378 = vst [vmem:[#allocation7 + $0xc8] sm:$0xff] %v1198
    %1379 = vst [vmem:[#allocation7 + $0xd0] sm:$0xff] %v1203
    %1380 = vst [vmem:[#allocation7 + $0xd8] sm:$0xff] %v1206
    %1381 = vst [vmem:[#allocation7 + $0xe0] sm:$0xff] %v1211
    %1382 = vst [vmem:[#allocation7 + $0xe8] sm:$0xff] %v1214
    %1383 = vst [vmem:[#allocation7 + $0xf0] sm:$0xff] %v1219
    %1384 = vst [vmem:[#allocation7 + $0xf8] sm:$0xff] %v1222
    %1385 = vst [vmem:[#allocation7 + $0x100] sm:$0xff] %v1227
    %1386 = vst [vmem:[#allocation7 + $0x108] sm:$0xff] %v1230
    %1387 = vst [vmem:[#allocation7 + $0x110] sm:$0xff] %v1235
    %1388 = vst [vmem:[#allocation7 + $0x118] sm:$0xff] %v1238
    %1389 = vst [vmem:[#allocation7 + $0x120] sm:$0xff] %v1243
    %1390 = vst [vmem:[#allocation7 + $0x128] sm:$0xff] %v1246
    %1391 = vst [vmem:[#allocation7 + $0x130] sm:$0xff] %v1251
    %1392 = vst [vmem:[#allocation7 + $0x138] sm:$0xff] %v1254
    %1393 = vst [vmem:[#allocation7 + $0x140] sm:$0xff] %v1259
    %1394 = vst [vmem:[#allocation7 + $0x148] sm:$0xff] %v1262
    %1395 = vst [vmem:[#allocation7 + $0x150] sm:$0xff] %v1267
    %1396 = vst [vmem:[#allocation7 + $0x158] sm:$0xff] %v1270
    %1397 = vst [vmem:[#allocation7 + $0x160] sm:$0xff] %v1275
    %1398 = vst [vmem:[#allocation7 + $0x168] sm:$0xff] %v1278
    %1399 = vst [vmem:[#allocation7 + $0x170] sm:$0xff] %v1283
    %1400 = vst [vmem:[#allocation7 + $0x178] sm:$0xff] %v1286
    %1401 = vst [vmem:[#allocation7 + $0x180] sm:$0xff] %v1291
    %1402 = vst [vmem:[#allocation7 + $0x188] sm:$0xff] %v1294
    %1403 = vst [vmem:[#allocation7 + $0x190] sm:$0xff] %v1299
    %1404 = vst [vmem:[#allocation7 + $0x198] sm:$0xff] %v1302
    %1405 = vst [vmem:[#allocation7 + $0x1a0] sm:$0xff] %v1307
    %1406 = vst [vmem:[#allocation7 + $0x1a8] sm:$0xff] %v1310
    %1407 = vst [vmem:[#allocation7 + $0x1b0] sm:$0xff] %v1315
    %1408 = vst [vmem:[#allocation7 + $0x1b8] sm:$0xff] %v1318
    %1409 = vst [vmem:[#allocation7 + $0x1c0] sm:$0xff] %v1323
    %1410 = vst [vmem:[#allocation7 + $0x1c8] sm:$0xff] %v1326
    %1411 = vst [vmem:[#allocation7 + $0x1d0] sm:$0xff] %v1331
    %1412 = vst [vmem:[#allocation7 + $0x1d8] sm:$0xff] %v1334
    %1413 = vst [vmem:[#allocation7 + $0x1e0] sm:$0xff] %v1339
    %1414 = vst [vmem:[#allocation7 + $0x1e8] sm:$0xff] %v1342
    %1415 = vst [vmem:[#allocation7 + $0x1f0] sm:$0xff] %v1347
    %1416 = vst [vmem:[#allocation7 + $0x1f8] sm:$0xff] %v1350
    // Predicated region
    $region30: #{tpu_custom_call.1} parent=1 // pred_check
      _
    $region31: #{tpu_custom_call.1} parent=1 // pred_check_branch
      %1418 = sbr.rel (0) target = $region33
    $region32: #{tpu_custom_call.1} parent=1 // pred_region
      %s1420 = ssub.s32 8192, 8192
      %1421 = vsyncadd [#allocation4], %s1420
      %s1422 = sshll.u32 [#allocation7], 4
      %s1423 = int_to_ptr.vmem [resolvable:$true] %s1422
      %1428 = dma.vmem_to_hbm [thread:$0]  %s1423, 8192, %s5, [#allocation4], 128, 128, 8
    $region33: #{tpu_custom_call.1} parent=1 // pred_fallthru
      _
    // Predicated region
    $region34: #{tpu_custom_call.1} parent=1 // pred_check
      _
    $region35: #{tpu_custom_call.1} parent=1 // pred_check_branch
      %1430 = sbr.rel (0) target = $region37
    $region36: #{tpu_custom_call.1} parent=1 // pred_region
      %1431 = dma.done [#allocation4], 8192
    $region37: #{tpu_custom_call.1} parent=1 // pred_fallthru
      _
    %1432 = vsyncpa [#allocation3], 1
    %1433 = vsyncpa [#allocation6], 1
    %1434 = vsyncpa [#allocation4], 1

</llo_original>
